<compile_context>
chip_gen: v5e
topology: v5e:2x2
jax: 0.10.0
libtpu: 0.0.40
codegen_flags: <defaults>
</compile_context>

<pallas_src>
import jax
import jax.numpy as jnp
from jax import lax
from jax.experimental import pallas as pl
from jax.experimental.pallas import tpu as pltpu


# ---------------------------------------------------------------------------
# Single fused kernel: masked LSTM (all docs batched) + doc-sum + head
# ---------------------------------------------------------------------------
def make_fused_kernel(T, D, S, L):
    DS = D * S

    def kernel(x_ref, len_ref, wih_ref, whh_ref, b_ref, summat_ref,
               wh_ref, bh_ref, gam_ref, bet_ref, mu_ref, var_ref,
               wp_ref, bp_ref, out_ref):
        # x_ref:      (T*DS, E) bf16  time-major embedded tokens (all docs)
        # len_ref:    (DS, 1)   int32 sentence lengths
        # wih_ref:    (E, 4L)   bf16  W_ih^T  (PyTorch gate order i, f, g, o)
        # whh_ref:    (L, 4L)   bf16  W_hh^T
        # b_ref:      (1, 4L)   f32   b_ih + b_hh
        # summat_ref: (D, DS)   f32   0/1 per-document summing matrix
        # wh/bh, bn params, wp/bp: head parameters
        # out_ref:    (D, NL)   f32   softmax over dim=0
        lens = len_ref[...]                                   # (DS, 1) int32
        bias = b_ref[...]                                     # (1, 4L) f32
        whh = whh_ref[...]                                    # (L, 4L) bf16

        # Hoisted input projection: one MXU call instead of T tiny ones.
        x_proj = jnp.dot(x_ref[...], wih_ref[...],
                         preferred_element_type=jnp.float32)  # (T*DS, 4L) f32

        h = jnp.zeros((DS, L), jnp.float32)
        c = jnp.zeros((DS, L), jnp.float32)

        # Fully-unrolled recurrence (T is static): static slices, bf16 MXU
        # operands, f32 state & elementwise math.
        for t in range(T):
            gates = (x_proj[t * DS:(t + 1) * DS, :]
                     + jnp.dot(h.astype(jnp.bfloat16), whh,
                               preferred_element_type=jnp.float32)
                     + bias)                                   # (DS, 4L)
            i_g = jax.nn.sigmoid(gates[:, 0 * L:1 * L])
            f_g = jax.nn.sigmoid(gates[:, 1 * L:2 * L])
            g_g = jnp.tanh(gates[:, 2 * L:3 * L])
            o_g = jax.nn.sigmoid(gates[:, 3 * L:4 * L])
            c_new = f_g * c + i_g * g_g
            h_new = o_g * jnp.tanh(c_new)
            # packed-sequence semantics: only update rows still inside length
            valid = t < lens                                   # (DS, 1) bool
            h = jnp.where(valid, h_new, h)
            c = jnp.where(valid, c_new, c)

        # Per-document sum over sentences as one exact f32 matmul.
        # (torch.gather-unsort is a permutation, so sum over sorted == sum.)
        doc_vecs = jnp.dot(summat_ref[...], h,
                           preferred_element_type=jnp.float32)  # (D, L)

        # Fused head: Linear + ReLU + BatchNorm1d(eval) + Linear + softmax(0)
        hid = jnp.dot(doc_vecs.astype(jnp.bfloat16), wh_ref[...],
                      preferred_element_type=jnp.float32) + bh_ref[...]
        hid = jnp.maximum(hid, 0.0)
        hid = ((hid - mu_ref[...]) * lax.rsqrt(var_ref[...] + 1e-5)
               * gam_ref[...] + bet_ref[...])
        # dropout: identity at inference
        logits = jnp.dot(hid.astype(jnp.bfloat16), wp_ref[...],
                         preferred_element_type=jnp.float32) + bp_ref[...]
        m = jnp.max(logits, axis=0, keepdims=True)
        e = jnp.exp(logits - m)
        out_ref[...] = e / jnp.sum(e, axis=0, keepdims=True)

    return kernel


# ---------------------------------------------------------------------------
# Full forward (glue in plain JAX: embedding lookup, transpose, dtype prep)
# ---------------------------------------------------------------------------
def lstm_sent_avg_forward(token_ids, lengths, params):
    # token_ids: (D, S, T) int32 ; lengths: (D, S) int32 (sorted desc per doc)
    D, S, T = token_ids.shape
    E = params["embed_table"].shape[1]
    L = params["whh_t"].shape[0]
    NL = params["wp_t"].shape[1]
    DS = D * S

    # Embedding lookup + time-major flatten (tiny gather, stays in plain JAX).
    embeds = params["embed_table"][token_ids]                 # (D, S, T, E)
    x = jnp.transpose(embeds, (2, 0, 1, 3)).reshape(T * DS, E)
    x = x.astype(jnp.bfloat16)                                # bf16 MXU operand

    lens = lengths.reshape(DS, 1).astype(jnp.int32)
    # 0/1 (D, D*S) matrix: row d sums the S sentence rows of document d.
    summat = (jnp.arange(DS, dtype=jnp.int32) // S
              == jnp.arange(D, dtype=jnp.int32)[:, None]).astype(jnp.float32)

    kernel = make_fused_kernel(T, D, S, L)
    vspec = pl.BlockSpec(memory_space=pltpu.MemorySpace.VMEM)
    return pl.pallas_call(
        kernel,
        out_shape=jax.ShapeDtypeStruct((D, NL), jnp.float32),
        in_specs=[vspec] * 14,
        out_specs=vspec,
    )(x, lens,
      params["wih_t"].astype(jnp.bfloat16),
      params["whh_t"].astype(jnp.bfloat16),
      params["lstm_b"], summat,
      params["wh_t"].astype(jnp.bfloat16), params["bh"],
      params["bn_gamma"], params["bn_beta"],
      params["bn_mean"], params["bn_var"],
      params["wp_t"].astype(jnp.bfloat16), params["bp"])


# ---------------------------------------------------------------------------
# Pure-JAX f32 reference for validation
# ---------------------------------------------------------------------------
def reference_forward(token_ids, lengths, params):
    embeds = params["embed_table"][token_ids]                 # (D, S, T, E)
    D, S, T, E = embeds.shape
    L = params["whh_t"].shape[0]
    doc_vecs = []
    for d in range(D):
        h = jnp.zeros((S, L), jnp.float32)
        c = jnp.zeros((S, L), jnp.float32)
        for t in range(T):
            xt = embeds[d, :, t, :]
            gates = xt @ params["wih_t"] + h @ params["whh_t"] + params["lstm_b"][0]
            i_g = jax.nn.sigmoid(gates[:, :L])
            f_g = jax.nn.sigmoid(gates[:, L:2 * L])
            g_g = jnp.tanh(gates[:, 2 * L:3 * L])
            o_g = jax.nn.sigmoid(gates[:, 3 * L:])
            cn = f_g * c + i_g * g_g
            hn = o_g * jnp.tanh(cn)
            m = (t < lengths[d])[:, None]
            h = jnp.where(m, hn, h)
            c = jnp.where(m, cn, c)
        doc_vecs.append(h.sum(0))
    doc_vecs = jnp.stack(doc_vecs)                            # (D, L)
    hid = jnp.maximum(doc_vecs @ params["wh_t"] + params["bh"][0], 0.0)
    hid = ((hid - params["bn_mean"][0]) / jnp.sqrt(params["bn_var"][0] + 1e-5)
           * params["bn_gamma"][0] + params["bn_beta"][0])
    logits = hid @ params["wp_t"] + params["bp"][0]
    return jax.nn.softmax(logits, axis=0)


if __name__ == "__main__":
    # Small shapes implied by the module: docs D, sentences/doc S, tokens T,
    # embedding E, lstm L, hidden H, vocab V, task='class' -> 3 labels.
    D, S, T, E, L, H, V, NL = 4, 6, 10, 32, 32, 32, 50, 3

    key = jax.random.PRNGKey(0)
    ks = jax.random.split(key, 10)

    params = {
        "embed_table": jax.random.normal(ks[0], (V, E), jnp.float32) * 0.1,
        # nn.LSTM weights (gate order i,f,g,o), stored transposed for x @ W^T
        "wih_t": jax.random.normal(ks[1], (E, 4 * L), jnp.float32) * 0.1,
        "whh_t": jax.random.normal(ks[2], (L, 4 * L), jnp.float32) * 0.1,
        "lstm_b": (jax.random.normal(ks[3], (1, 4 * L), jnp.float32) * 0.05),
        # hidden_layer: xavier-ish weight, zero bias
        "wh_t": jax.random.normal(ks[4], (L, H), jnp.float32) * 0.2,
        "bh": jnp.zeros((1, H), jnp.float32),
        # BatchNorm1d default init / running stats
        "bn_gamma": jnp.ones((1, H), jnp.float32),
        "bn_beta": jnp.zeros((1, H), jnp.float32),
        "bn_mean": jnp.zeros((1, H), jnp.float32),
        "bn_var": jnp.ones((1, H), jnp.float32),
        # predict_layer: xavier-ish weight, zero bias
        "wp_t": jax.random.normal(ks[5], (H, NL), jnp.float32) * 0.2,
        "bp": jnp.zeros((1, NL), jnp.float32),
    }

    token_ids = jax.random.randint(ks[6], (D, S, T), 0, V, dtype=jnp.int32)
    # pack_padded_sequence requires lengths sorted descending within a doc
    raw_lens = jax.random.randint(ks[7], (D, S), 1, T + 1, dtype=jnp.int32)
    lengths = jnp.sort(raw_lens, axis=1)[:, ::-1].astype(jnp.int32)

    out = lstm_sent_avg_forward(token_ids, lengths, params)
    out = jax.block_until_ready(out)

    ref = reference_forward(token_ids, lengths, params)
    assert out.shape == (D, NL)
    # bf16 MXU operands (f32 accumulate) -> slightly looser tolerance vs f32 ref
    assert jnp.allclose(out, ref, rtol=2e-2, atol=2e-2), (out, ref)
    print("KERNEL_OK")
</pallas_src>

<mosaic_0001>
module attributes {stable_mosaic.version = 11 : i64} {
  func.func @kernel(%arg0: memref<240x32xbf16, #tpu.memory_space<vmem>>, %arg1: memref<24x1xi32, #tpu.memory_space<vmem>>, %arg2: memref<32x128xbf16, #tpu.memory_space<vmem>>, %arg3: memref<32x128xbf16, #tpu.memory_space<vmem>>, %arg4: memref<1x128xf32, #tpu.memory_space<vmem>>, %arg5: memref<4x24xf32, #tpu.memory_space<vmem>>, %arg6: memref<32x32xbf16, #tpu.memory_space<vmem>>, %arg7: memref<1x32xf32, #tpu.memory_space<vmem>>, %arg8: memref<1x32xf32, #tpu.memory_space<vmem>>, %arg9: memref<1x32xf32, #tpu.memory_space<vmem>>, %arg10: memref<1x32xf32, #tpu.memory_space<vmem>>, %arg11: memref<1x32xf32, #tpu.memory_space<vmem>>, %arg12: memref<32x3xbf16, #tpu.memory_space<vmem>>, %arg13: memref<1x3xf32, #tpu.memory_space<vmem>>, %arg14: memref<4x3xf32, #tpu.memory_space<vmem>>) attributes {dimension_semantics = [], scalar_prefetch = 0 : i64, scratch_operands = 0 : i64, tpu.core_type = #tpu.core_type<tc>} {
    %c0 = arith.constant 0 : index
    %c0_0 = arith.constant 0 : index
    %0 = vector.load %arg1[%c0, %c0_0] : memref<24x1xi32, #tpu.memory_space<vmem>>, vector<24x1xi32>
    %c0_1 = arith.constant 0 : index
    %c0_2 = arith.constant 0 : index
    %1 = vector.load %arg4[%c0_1, %c0_2] : memref<1x128xf32, #tpu.memory_space<vmem>>, vector<1x128xf32>
    %c0_3 = arith.constant 0 : index
    %c0_4 = arith.constant 0 : index
    %2 = vector.load %arg3[%c0_3, %c0_4] : memref<32x128xbf16, #tpu.memory_space<vmem>>, vector<32x128xbf16>
    %c0_5 = arith.constant 0 : index
    %c0_6 = arith.constant 0 : index
    %3 = vector.load %arg0[%c0_5, %c0_6] : memref<240x32xbf16, #tpu.memory_space<vmem>>, vector<240x32xbf16>
    %c0_7 = arith.constant 0 : index
    %c0_8 = arith.constant 0 : index
    %4 = vector.load %arg2[%c0_7, %c0_8] : memref<32x128xbf16, #tpu.memory_space<vmem>>, vector<32x128xbf16>
    %cst = arith.constant dense<0.000000e+00> : vector<240x128xf32>
    %5 = tpu.matmul %3, %4, %cst {dimension_numbers = #tpu.dot_dimension_numbers<[1], [0], [0], [1], [0, 0, 1, 1], [], []>} : vector<240x32xbf16>, vector<32x128xbf16>, vector<240x128xf32> -> vector<240x128xf32>
    %cst_9 = arith.constant 0.000000e+00 : f32
    %6 = vector.broadcast %cst_9 : f32 to vector<24x32xf32>
    %cst_10 = arith.constant 0.000000e+00 : f32
    %7 = vector.broadcast %cst_10 : f32 to vector<24x32xf32>
    %8 = vector.extract_strided_slice %5 {offsets = [0, 0], sizes = [24, 128], strides = [1, 1]} : vector<240x128xf32> to vector<24x128xf32>
    %9 = arith.truncf %6 : vector<24x32xf32> to vector<24x32xbf16>
    %cst_11 = arith.constant dense<0.000000e+00> : vector<24x128xf32>
    %10 = tpu.matmul %9, %2, %cst_11 {dimension_numbers = #tpu.dot_dimension_numbers<[1], [0], [0], [1], [0, 0, 1, 1], [], []>} : vector<24x32xbf16>, vector<32x128xbf16>, vector<24x128xf32> -> vector<24x128xf32>
    %11 = arith.addf %8, %10 : vector<24x128xf32>
    %12 = vector.broadcast %1 : vector<1x128xf32> to vector<24x128xf32>
    %13 = arith.addf %11, %12 : vector<24x128xf32>
    %14 = vector.extract_strided_slice %13 {offsets = [0, 0], sizes = [24, 32], strides = [1, 1]} : vector<24x128xf32> to vector<24x32xf32>
    %15 = arith.negf %14 : vector<24x32xf32>
    %16 = math.exp %15 : vector<24x32xf32>
    %cst_12 = arith.constant 1.000000e+00 : f32
    %17 = vector.broadcast %cst_12 : f32 to vector<24x32xf32>
    %18 = arith.addf %17, %16 : vector<24x32xf32>
    %19 = arith.divf %17, %18 : vector<24x32xf32>
    %20 = vector.extract_strided_slice %13 {offsets = [0, 32], sizes = [24, 32], strides = [1, 1]} : vector<24x128xf32> to vector<24x32xf32>
    %21 = arith.negf %20 : vector<24x32xf32>
    %22 = math.exp %21 : vector<24x32xf32>
    %cst_13 = arith.constant 1.000000e+00 : f32
    %23 = vector.broadcast %cst_13 : f32 to vector<24x32xf32>
    %24 = arith.addf %23, %22 : vector<24x32xf32>
    %25 = arith.divf %23, %24 : vector<24x32xf32>
    %26 = vector.extract_strided_slice %13 {offsets = [0, 64], sizes = [24, 32], strides = [1, 1]} : vector<24x128xf32> to vector<24x32xf32>
    %27 = math.tanh %26 : vector<24x32xf32>
    %28 = vector.extract_strided_slice %13 {offsets = [0, 96], sizes = [24, 32], strides = [1, 1]} : vector<24x128xf32> to vector<24x32xf32>
    %29 = arith.negf %28 : vector<24x32xf32>
    %30 = math.exp %29 : vector<24x32xf32>
    %cst_14 = arith.constant 1.000000e+00 : f32
    %31 = vector.broadcast %cst_14 : f32 to vector<24x32xf32>
    %32 = arith.addf %31, %30 : vector<24x32xf32>
    %33 = arith.divf %31, %32 : vector<24x32xf32>
    %34 = arith.mulf %25, %7 : vector<24x32xf32>
    %35 = arith.mulf %19, %27 : vector<24x32xf32>
    %36 = arith.addf %34, %35 : vector<24x32xf32>
    %37 = math.tanh %36 : vector<24x32xf32>
    %38 = arith.mulf %33, %37 : vector<24x32xf32>
    %c0_i32 = arith.constant 0 : i32
    %39 = vector.broadcast %c0_i32 : i32 to vector<24x1xi32>
    %40 = arith.cmpi sgt, %0, %39 : vector<24x1xi32>
    %41 = vector.shape_cast %40 : vector<24x1xi1> to vector<24x1xi1>
    %42 = vector.broadcast %41 : vector<24x1xi1> to vector<24x32xi1>
    %43 = arith.select %42, %38, %6 : vector<24x32xi1>, vector<24x32xf32>
    %44 = vector.shape_cast %40 : vector<24x1xi1> to vector<24x1xi1>
    %45 = vector.broadcast %44 : vector<24x1xi1> to vector<24x32xi1>
    %46 = arith.select %45, %36, %7 : vector<24x32xi1>, vector<24x32xf32>
    %47 = vector.extract_strided_slice %5 {offsets = [24, 0], sizes = [24, 128], strides = [1, 1]} : vector<240x128xf32> to vector<24x128xf32>
    %48 = arith.truncf %43 : vector<24x32xf32> to vector<24x32xbf16>
    %cst_15 = arith.constant dense<0.000000e+00> : vector<24x128xf32>
    %49 = tpu.matmul %48, %2, %cst_15 {dimension_numbers = #tpu.dot_dimension_numbers<[1], [0], [0], [1], [0, 0, 1, 1], [], []>} : vector<24x32xbf16>, vector<32x128xbf16>, vector<24x128xf32> -> vector<24x128xf32>
    %50 = arith.addf %47, %49 : vector<24x128xf32>
    %51 = vector.broadcast %1 : vector<1x128xf32> to vector<24x128xf32>
    %52 = arith.addf %50, %51 : vector<24x128xf32>
    %53 = vector.extract_strided_slice %52 {offsets = [0, 0], sizes = [24, 32], strides = [1, 1]} : vector<24x128xf32> to vector<24x32xf32>
    %54 = arith.negf %53 : vector<24x32xf32>
    %55 = math.exp %54 : vector<24x32xf32>
    %cst_16 = arith.constant 1.000000e+00 : f32
    %56 = vector.broadcast %cst_16 : f32 to vector<24x32xf32>
    %57 = arith.addf %56, %55 : vector<24x32xf32>
    %58 = arith.divf %56, %57 : vector<24x32xf32>
    %59 = vector.extract_strided_slice %52 {offsets = [0, 32], sizes = [24, 32], strides = [1, 1]} : vector<24x128xf32> to vector<24x32xf32>
    %60 = arith.negf %59 : vector<24x32xf32>
    %61 = math.exp %60 : vector<24x32xf32>
    %cst_17 = arith.constant 1.000000e+00 : f32
    %62 = vector.broadcast %cst_17 : f32 to vector<24x32xf32>
    %63 = arith.addf %62, %61 : vector<24x32xf32>
    %64 = arith.divf %62, %63 : vector<24x32xf32>
    %65 = vector.extract_strided_slice %52 {offsets = [0, 64], sizes = [24, 32], strides = [1, 1]} : vector<24x128xf32> to vector<24x32xf32>
    %66 = math.tanh %65 : vector<24x32xf32>
    %67 = vector.extract_strided_slice %52 {offsets = [0, 96], sizes = [24, 32], strides = [1, 1]} : vector<24x128xf32> to vector<24x32xf32>
    %68 = arith.negf %67 : vector<24x32xf32>
    %69 = math.exp %68 : vector<24x32xf32>
    %cst_18 = arith.constant 1.000000e+00 : f32
    %70 = vector.broadcast %cst_18 : f32 to vector<24x32xf32>
    %71 = arith.addf %70, %69 : vector<24x32xf32>
    %72 = arith.divf %70, %71 : vector<24x32xf32>
    %73 = arith.mulf %64, %46 : vector<24x32xf32>
    %74 = arith.mulf %58, %66 : vector<24x32xf32>
    %75 = arith.addf %73, %74 : vector<24x32xf32>
    %76 = math.tanh %75 : vector<24x32xf32>
    %77 = arith.mulf %72, %76 : vector<24x32xf32>
    %c1_i32 = arith.constant 1 : i32
    %78 = vector.broadcast %c1_i32 : i32 to vector<24x1xi32>
    %79 = arith.cmpi sgt, %0, %78 : vector<24x1xi32>
    %80 = vector.shape_cast %79 : vector<24x1xi1> to vector<24x1xi1>
    %81 = vector.broadcast %80 : vector<24x1xi1> to vector<24x32xi1>
    %82 = arith.select %81, %77, %43 : vector<24x32xi1>, vector<24x32xf32>
    %83 = vector.shape_cast %79 : vector<24x1xi1> to vector<24x1xi1>
    %84 = vector.broadcast %83 : vector<24x1xi1> to vector<24x32xi1>
    %85 = arith.select %84, %75, %46 : vector<24x32xi1>, vector<24x32xf32>
    %86 = vector.extract_strided_slice %5 {offsets = [48, 0], sizes = [24, 128], strides = [1, 1]} : vector<240x128xf32> to vector<24x128xf32>
    %87 = arith.truncf %82 : vector<24x32xf32> to vector<24x32xbf16>
    %cst_19 = arith.constant dense<0.000000e+00> : vector<24x128xf32>
    %88 = tpu.matmul %87, %2, %cst_19 {dimension_numbers = #tpu.dot_dimension_numbers<[1], [0], [0], [1], [0, 0, 1, 1], [], []>} : vector<24x32xbf16>, vector<32x128xbf16>, vector<24x128xf32> -> vector<24x128xf32>
    %89 = arith.addf %86, %88 : vector<24x128xf32>
    %90 = vector.broadcast %1 : vector<1x128xf32> to vector<24x128xf32>
    %91 = arith.addf %89, %90 : vector<24x128xf32>
    %92 = vector.extract_strided_slice %91 {offsets = [0, 0], sizes = [24, 32], strides = [1, 1]} : vector<24x128xf32> to vector<24x32xf32>
    %93 = arith.negf %92 : vector<24x32xf32>
    %94 = math.exp %93 : vector<24x32xf32>
    %cst_20 = arith.constant 1.000000e+00 : f32
    %95 = vector.broadcast %cst_20 : f32 to vector<24x32xf32>
    %96 = arith.addf %95, %94 : vector<24x32xf32>
    %97 = arith.divf %95, %96 : vector<24x32xf32>
    %98 = vector.extract_strided_slice %91 {offsets = [0, 32], sizes = [24, 32], strides = [1, 1]} : vector<24x128xf32> to vector<24x32xf32>
    %99 = arith.negf %98 : vector<24x32xf32>
    %100 = math.exp %99 : vector<24x32xf32>
    %cst_21 = arith.constant 1.000000e+00 : f32
    %101 = vector.broadcast %cst_21 : f32 to vector<24x32xf32>
    %102 = arith.addf %101, %100 : vector<24x32xf32>
    %103 = arith.divf %101, %102 : vector<24x32xf32>
    %104 = vector.extract_strided_slice %91 {offsets = [0, 64], sizes = [24, 32], strides = [1, 1]} : vector<24x128xf32> to vector<24x32xf32>
    %105 = math.tanh %104 : vector<24x32xf32>
    %106 = vector.extract_strided_slice %91 {offsets = [0, 96], sizes = [24, 32], strides = [1, 1]} : vector<24x128xf32> to vector<24x32xf32>
    %107 = arith.negf %106 : vector<24x32xf32>
    %108 = math.exp %107 : vector<24x32xf32>
    %cst_22 = arith.constant 1.000000e+00 : f32
    %109 = vector.broadcast %cst_22 : f32 to vector<24x32xf32>
    %110 = arith.addf %109, %108 : vector<24x32xf32>
    %111 = arith.divf %109, %110 : vector<24x32xf32>
    %112 = arith.mulf %103, %85 : vector<24x32xf32>
    %113 = arith.mulf %97, %105 : vector<24x32xf32>
    %114 = arith.addf %112, %113 : vector<24x32xf32>
    %115 = math.tanh %114 : vector<24x32xf32>
    %116 = arith.mulf %111, %115 : vector<24x32xf32>
    %c2_i32 = arith.constant 2 : i32
    %117 = vector.broadcast %c2_i32 : i32 to vector<24x1xi32>
    %118 = arith.cmpi sgt, %0, %117 : vector<24x1xi32>
    %119 = vector.shape_cast %118 : vector<24x1xi1> to vector<24x1xi1>
    %120 = vector.broadcast %119 : vector<24x1xi1> to vector<24x32xi1>
    %121 = arith.select %120, %116, %82 : vector<24x32xi1>, vector<24x32xf32>
    %122 = vector.shape_cast %118 : vector<24x1xi1> to vector<24x1xi1>
    %123 = vector.broadcast %122 : vector<24x1xi1> to vector<24x32xi1>
    %124 = arith.select %123, %114, %85 : vector<24x32xi1>, vector<24x32xf32>
    %125 = vector.extract_strided_slice %5 {offsets = [72, 0], sizes = [24, 128], strides = [1, 1]} : vector<240x128xf32> to vector<24x128xf32>
    %126 = arith.truncf %121 : vector<24x32xf32> to vector<24x32xbf16>
    %cst_23 = arith.constant dense<0.000000e+00> : vector<24x128xf32>
    %127 = tpu.matmul %126, %2, %cst_23 {dimension_numbers = #tpu.dot_dimension_numbers<[1], [0], [0], [1], [0, 0, 1, 1], [], []>} : vector<24x32xbf16>, vector<32x128xbf16>, vector<24x128xf32> -> vector<24x128xf32>
    %128 = arith.addf %125, %127 : vector<24x128xf32>
    %129 = vector.broadcast %1 : vector<1x128xf32> to vector<24x128xf32>
    %130 = arith.addf %128, %129 : vector<24x128xf32>
    %131 = vector.extract_strided_slice %130 {offsets = [0, 0], sizes = [24, 32], strides = [1, 1]} : vector<24x128xf32> to vector<24x32xf32>
    %132 = arith.negf %131 : vector<24x32xf32>
    %133 = math.exp %132 : vector<24x32xf32>
    %cst_24 = arith.constant 1.000000e+00 : f32
    %134 = vector.broadcast %cst_24 : f32 to vector<24x32xf32>
    %135 = arith.addf %134, %133 : vector<24x32xf32>
    %136 = arith.divf %134, %135 : vector<24x32xf32>
    %137 = vector.extract_strided_slice %130 {offsets = [0, 32], sizes = [24, 32], strides = [1, 1]} : vector<24x128xf32> to vector<24x32xf32>
    %138 = arith.negf %137 : vector<24x32xf32>
    %139 = math.exp %138 : vector<24x32xf32>
    %cst_25 = arith.constant 1.000000e+00 : f32
    %140 = vector.broadcast %cst_25 : f32 to vector<24x32xf32>
    %141 = arith.addf %140, %139 : vector<24x32xf32>
    %142 = arith.divf %140, %141 : vector<24x32xf32>
    %143 = vector.extract_strided_slice %130 {offsets = [0, 64], sizes = [24, 32], strides = [1, 1]} : vector<24x128xf32> to vector<24x32xf32>
    %144 = math.tanh %143 : vector<24x32xf32>
    %145 = vector.extract_strided_slice %130 {offsets = [0, 96], sizes = [24, 32], strides = [1, 1]} : vector<24x128xf32> to vector<24x32xf32>
    %146 = arith.negf %145 : vector<24x32xf32>
    %147 = math.exp %146 : vector<24x32xf32>
    %cst_26 = arith.constant 1.000000e+00 : f32
    %148 = vector.broadcast %cst_26 : f32 to vector<24x32xf32>
    %149 = arith.addf %148, %147 : vector<24x32xf32>
    %150 = arith.divf %148, %149 : vector<24x32xf32>
    %151 = arith.mulf %142, %124 : vector<24x32xf32>
    %152 = arith.mulf %136, %144 : vector<24x32xf32>
    %153 = arith.addf %151, %152 : vector<24x32xf32>
    %154 = math.tanh %153 : vector<24x32xf32>
    %155 = arith.mulf %150, %154 : vector<24x32xf32>
    %c3_i32 = arith.constant 3 : i32
    %156 = vector.broadcast %c3_i32 : i32 to vector<24x1xi32>
    %157 = arith.cmpi sgt, %0, %156 : vector<24x1xi32>
    %158 = vector.shape_cast %157 : vector<24x1xi1> to vector<24x1xi1>
    %159 = vector.broadcast %158 : vector<24x1xi1> to vector<24x32xi1>
    %160 = arith.select %159, %155, %121 : vector<24x32xi1>, vector<24x32xf32>
    %161 = vector.shape_cast %157 : vector<24x1xi1> to vector<24x1xi1>
    %162 = vector.broadcast %161 : vector<24x1xi1> to vector<24x32xi1>
    %163 = arith.select %162, %153, %124 : vector<24x32xi1>, vector<24x32xf32>
    %164 = vector.extract_strided_slice %5 {offsets = [96, 0], sizes = [24, 128], strides = [1, 1]} : vector<240x128xf32> to vector<24x128xf32>
    %165 = arith.truncf %160 : vector<24x32xf32> to vector<24x32xbf16>
    %cst_27 = arith.constant dense<0.000000e+00> : vector<24x128xf32>
    %166 = tpu.matmul %165, %2, %cst_27 {dimension_numbers = #tpu.dot_dimension_numbers<[1], [0], [0], [1], [0, 0, 1, 1], [], []>} : vector<24x32xbf16>, vector<32x128xbf16>, vector<24x128xf32> -> vector<24x128xf32>
    %167 = arith.addf %164, %166 : vector<24x128xf32>
    %168 = vector.broadcast %1 : vector<1x128xf32> to vector<24x128xf32>
    %169 = arith.addf %167, %168 : vector<24x128xf32>
    %170 = vector.extract_strided_slice %169 {offsets = [0, 0], sizes = [24, 32], strides = [1, 1]} : vector<24x128xf32> to vector<24x32xf32>
    %171 = arith.negf %170 : vector<24x32xf32>
    %172 = math.exp %171 : vector<24x32xf32>
    %cst_28 = arith.constant 1.000000e+00 : f32
    %173 = vector.broadcast %cst_28 : f32 to vector<24x32xf32>
    %174 = arith.addf %173, %172 : vector<24x32xf32>
    %175 = arith.divf %173, %174 : vector<24x32xf32>
    %176 = vector.extract_strided_slice %169 {offsets = [0, 32], sizes = [24, 32], strides = [1, 1]} : vector<24x128xf32> to vector<24x32xf32>
    %177 = arith.negf %176 : vector<24x32xf32>
    %178 = math.exp %177 : vector<24x32xf32>
    %cst_29 = arith.constant 1.000000e+00 : f32
    %179 = vector.broadcast %cst_29 : f32 to vector<24x32xf32>
    %180 = arith.addf %179, %178 : vector<24x32xf32>
    %181 = arith.divf %179, %180 : vector<24x32xf32>
    %182 = vector.extract_strided_slice %169 {offsets = [0, 64], sizes = [24, 32], strides = [1, 1]} : vector<24x128xf32> to vector<24x32xf32>
    %183 = math.tanh %182 : vector<24x32xf32>
    %184 = vector.extract_strided_slice %169 {offsets = [0, 96], sizes = [24, 32], strides = [1, 1]} : vector<24x128xf32> to vector<24x32xf32>
    %185 = arith.negf %184 : vector<24x32xf32>
    %186 = math.exp %185 : vector<24x32xf32>
    %cst_30 = arith.constant 1.000000e+00 : f32
    %187 = vector.broadcast %cst_30 : f32 to vector<24x32xf32>
    %188 = arith.addf %187, %186 : vector<24x32xf32>
    %189 = arith.divf %187, %188 : vector<24x32xf32>
    %190 = arith.mulf %181, %163 : vector<24x32xf32>
    %191 = arith.mulf %175, %183 : vector<24x32xf32>
    %192 = arith.addf %190, %191 : vector<24x32xf32>
    %193 = math.tanh %192 : vector<24x32xf32>
    %194 = arith.mulf %189, %193 : vector<24x32xf32>
    %c4_i32 = arith.constant 4 : i32
    %195 = vector.broadcast %c4_i32 : i32 to vector<24x1xi32>
    %196 = arith.cmpi sgt, %0, %195 : vector<24x1xi32>
    %197 = vector.shape_cast %196 : vector<24x1xi1> to vector<24x1xi1>
    %198 = vector.broadcast %197 : vector<24x1xi1> to vector<24x32xi1>
    %199 = arith.select %198, %194, %160 : vector<24x32xi1>, vector<24x32xf32>
    %200 = vector.shape_cast %196 : vector<24x1xi1> to vector<24x1xi1>
    %201 = vector.broadcast %200 : vector<24x1xi1> to vector<24x32xi1>
    %202 = arith.select %201, %192, %163 : vector<24x32xi1>, vector<24x32xf32>
    %203 = vector.extract_strided_slice %5 {offsets = [120, 0], sizes = [24, 128], strides = [1, 1]} : vector<240x128xf32> to vector<24x128xf32>
    %204 = arith.truncf %199 : vector<24x32xf32> to vector<24x32xbf16>
    %cst_31 = arith.constant dense<0.000000e+00> : vector<24x128xf32>
    %205 = tpu.matmul %204, %2, %cst_31 {dimension_numbers = #tpu.dot_dimension_numbers<[1], [0], [0], [1], [0, 0, 1, 1], [], []>} : vector<24x32xbf16>, vector<32x128xbf16>, vector<24x128xf32> -> vector<24x128xf32>
    %206 = arith.addf %203, %205 : vector<24x128xf32>
    %207 = vector.broadcast %1 : vector<1x128xf32> to vector<24x128xf32>
    %208 = arith.addf %206, %207 : vector<24x128xf32>
    %209 = vector.extract_strided_slice %208 {offsets = [0, 0], sizes = [24, 32], strides = [1, 1]} : vector<24x128xf32> to vector<24x32xf32>
    %210 = arith.negf %209 : vector<24x32xf32>
    %211 = math.exp %210 : vector<24x32xf32>
    %cst_32 = arith.constant 1.000000e+00 : f32
    %212 = vector.broadcast %cst_32 : f32 to vector<24x32xf32>
    %213 = arith.addf %212, %211 : vector<24x32xf32>
    %214 = arith.divf %212, %213 : vector<24x32xf32>
    %215 = vector.extract_strided_slice %208 {offsets = [0, 32], sizes = [24, 32], strides = [1, 1]} : vector<24x128xf32> to vector<24x32xf32>
    %216 = arith.negf %215 : vector<24x32xf32>
    %217 = math.exp %216 : vector<24x32xf32>
    %cst_33 = arith.constant 1.000000e+00 : f32
    %218 = vector.broadcast %cst_33 : f32 to vector<24x32xf32>
    %219 = arith.addf %218, %217 : vector<24x32xf32>
    %220 = arith.divf %218, %219 : vector<24x32xf32>
    %221 = vector.extract_strided_slice %208 {offsets = [0, 64], sizes = [24, 32], strides = [1, 1]} : vector<24x128xf32> to vector<24x32xf32>
    %222 = math.tanh %221 : vector<24x32xf32>
    %223 = vector.extract_strided_slice %208 {offsets = [0, 96], sizes = [24, 32], strides = [1, 1]} : vector<24x128xf32> to vector<24x32xf32>
    %224 = arith.negf %223 : vector<24x32xf32>
    %225 = math.exp %224 : vector<24x32xf32>
    %cst_34 = arith.constant 1.000000e+00 : f32
    %226 = vector.broadcast %cst_34 : f32 to vector<24x32xf32>
    %227 = arith.addf %226, %225 : vector<24x32xf32>
    %228 = arith.divf %226, %227 : vector<24x32xf32>
    %229 = arith.mulf %220, %202 : vector<24x32xf32>
    %230 = arith.mulf %214, %222 : vector<24x32xf32>
    %231 = arith.addf %229, %230 : vector<24x32xf32>
    %232 = math.tanh %231 : vector<24x32xf32>
    %233 = arith.mulf %228, %232 : vector<24x32xf32>
    %c5_i32 = arith.constant 5 : i32
    %234 = vector.broadcast %c5_i32 : i32 to vector<24x1xi32>
    %235 = arith.cmpi sgt, %0, %234 : vector<24x1xi32>
    %236 = vector.shape_cast %235 : vector<24x1xi1> to vector<24x1xi1>
    %237 = vector.broadcast %236 : vector<24x1xi1> to vector<24x32xi1>
    %238 = arith.select %237, %233, %199 : vector<24x32xi1>, vector<24x32xf32>
    %239 = vector.shape_cast %235 : vector<24x1xi1> to vector<24x1xi1>
    %240 = vector.broadcast %239 : vector<24x1xi1> to vector<24x32xi1>
    %241 = arith.select %240, %231, %202 : vector<24x32xi1>, vector<24x32xf32>
    %242 = vector.extract_strided_slice %5 {offsets = [144, 0], sizes = [24, 128], strides = [1, 1]} : vector<240x128xf32> to vector<24x128xf32>
    %243 = arith.truncf %238 : vector<24x32xf32> to vector<24x32xbf16>
    %cst_35 = arith.constant dense<0.000000e+00> : vector<24x128xf32>
    %244 = tpu.matmul %243, %2, %cst_35 {dimension_numbers = #tpu.dot_dimension_numbers<[1], [0], [0], [1], [0, 0, 1, 1], [], []>} : vector<24x32xbf16>, vector<32x128xbf16>, vector<24x128xf32> -> vector<24x128xf32>
    %245 = arith.addf %242, %244 : vector<24x128xf32>
    %246 = vector.broadcast %1 : vector<1x128xf32> to vector<24x128xf32>
    %247 = arith.addf %245, %246 : vector<24x128xf32>
    %248 = vector.extract_strided_slice %247 {offsets = [0, 0], sizes = [24, 32], strides = [1, 1]} : vector<24x128xf32> to vector<24x32xf32>
    %249 = arith.negf %248 : vector<24x32xf32>
    %250 = math.exp %249 : vector<24x32xf32>
    %cst_36 = arith.constant 1.000000e+00 : f32
    %251 = vector.broadcast %cst_36 : f32 to vector<24x32xf32>
    %252 = arith.addf %251, %250 : vector<24x32xf32>
    %253 = arith.divf %251, %252 : vector<24x32xf32>
    %254 = vector.extract_strided_slice %247 {offsets = [0, 32], sizes = [24, 32], strides = [1, 1]} : vector<24x128xf32> to vector<24x32xf32>
    %255 = arith.negf %254 : vector<24x32xf32>
    %256 = math.exp %255 : vector<24x32xf32>
    %cst_37 = arith.constant 1.000000e+00 : f32
    %257 = vector.broadcast %cst_37 : f32 to vector<24x32xf32>
    %258 = arith.addf %257, %256 : vector<24x32xf32>
    %259 = arith.divf %257, %258 : vector<24x32xf32>
    %260 = vector.extract_strided_slice %247 {offsets = [0, 64], sizes = [24, 32], strides = [1, 1]} : vector<24x128xf32> to vector<24x32xf32>
    %261 = math.tanh %260 : vector<24x32xf32>
    %262 = vector.extract_strided_slice %247 {offsets = [0, 96], sizes = [24, 32], strides = [1, 1]} : vector<24x128xf32> to vector<24x32xf32>
    %263 = arith.negf %262 : vector<24x32xf32>
    %264 = math.exp %263 : vector<24x32xf32>
    %cst_38 = arith.constant 1.000000e+00 : f32
    %265 = vector.broadcast %cst_38 : f32 to vector<24x32xf32>
    %266 = arith.addf %265, %264 : vector<24x32xf32>
    %267 = arith.divf %265, %266 : vector<24x32xf32>
    %268 = arith.mulf %259, %241 : vector<24x32xf32>
    %269 = arith.mulf %253, %261 : vector<24x32xf32>
    %270 = arith.addf %268, %269 : vector<24x32xf32>
    %271 = math.tanh %270 : vector<24x32xf32>
    %272 = arith.mulf %267, %271 : vector<24x32xf32>
    %c6_i32 = arith.constant 6 : i32
    %273 = vector.broadcast %c6_i32 : i32 to vector<24x1xi32>
    %274 = arith.cmpi sgt, %0, %273 : vector<24x1xi32>
    %275 = vector.shape_cast %274 : vector<24x1xi1> to vector<24x1xi1>
    %276 = vector.broadcast %275 : vector<24x1xi1> to vector<24x32xi1>
    %277 = arith.select %276, %272, %238 : vector<24x32xi1>, vector<24x32xf32>
    %278 = vector.shape_cast %274 : vector<24x1xi1> to vector<24x1xi1>
    %279 = vector.broadcast %278 : vector<24x1xi1> to vector<24x32xi1>
    %280 = arith.select %279, %270, %241 : vector<24x32xi1>, vector<24x32xf32>
    %281 = vector.extract_strided_slice %5 {offsets = [168, 0], sizes = [24, 128], strides = [1, 1]} : vector<240x128xf32> to vector<24x128xf32>
    %282 = arith.truncf %277 : vector<24x32xf32> to vector<24x32xbf16>
    %cst_39 = arith.constant dense<0.000000e+00> : vector<24x128xf32>
    %283 = tpu.matmul %282, %2, %cst_39 {dimension_numbers = #tpu.dot_dimension_numbers<[1], [0], [0], [1], [0, 0, 1, 1], [], []>} : vector<24x32xbf16>, vector<32x128xbf16>, vector<24x128xf32> -> vector<24x128xf32>
    %284 = arith.addf %281, %283 : vector<24x128xf32>
    %285 = vector.broadcast %1 : vector<1x128xf32> to vector<24x128xf32>
    %286 = arith.addf %284, %285 : vector<24x128xf32>
    %287 = vector.extract_strided_slice %286 {offsets = [0, 0], sizes = [24, 32], strides = [1, 1]} : vector<24x128xf32> to vector<24x32xf32>
    %288 = arith.negf %287 : vector<24x32xf32>
    %289 = math.exp %288 : vector<24x32xf32>
    %cst_40 = arith.constant 1.000000e+00 : f32
    %290 = vector.broadcast %cst_40 : f32 to vector<24x32xf32>
    %291 = arith.addf %290, %289 : vector<24x32xf32>
    %292 = arith.divf %290, %291 : vector<24x32xf32>
    %293 = vector.extract_strided_slice %286 {offsets = [0, 32], sizes = [24, 32], strides = [1, 1]} : vector<24x128xf32> to vector<24x32xf32>
    %294 = arith.negf %293 : vector<24x32xf32>
    %295 = math.exp %294 : vector<24x32xf32>
    %cst_41 = arith.constant 1.000000e+00 : f32
    %296 = vector.broadcast %cst_41 : f32 to vector<24x32xf32>
    %297 = arith.addf %296, %295 : vector<24x32xf32>
    %298 = arith.divf %296, %297 : vector<24x32xf32>
    %299 = vector.extract_strided_slice %286 {offsets = [0, 64], sizes = [24, 32], strides = [1, 1]} : vector<24x128xf32> to vector<24x32xf32>
    %300 = math.tanh %299 : vector<24x32xf32>
    %301 = vector.extract_strided_slice %286 {offsets = [0, 96], sizes = [24, 32], strides = [1, 1]} : vector<24x128xf32> to vector<24x32xf32>
    %302 = arith.negf %301 : vector<24x32xf32>
    %303 = math.exp %302 : vector<24x32xf32>
    %cst_42 = arith.constant 1.000000e+00 : f32
    %304 = vector.broadcast %cst_42 : f32 to vector<24x32xf32>
    %305 = arith.addf %304, %303 : vector<24x32xf32>
    %306 = arith.divf %304, %305 : vector<24x32xf32>
    %307 = arith.mulf %298, %280 : vector<24x32xf32>
    %308 = arith.mulf %292, %300 : vector<24x32xf32>
    %309 = arith.addf %307, %308 : vector<24x32xf32>
    %310 = math.tanh %309 : vector<24x32xf32>
    %311 = arith.mulf %306, %310 : vector<24x32xf32>
    %c7_i32 = arith.constant 7 : i32
    %312 = vector.broadcast %c7_i32 : i32 to vector<24x1xi32>
    %313 = arith.cmpi sgt, %0, %312 : vector<24x1xi32>
    %314 = vector.shape_cast %313 : vector<24x1xi1> to vector<24x1xi1>
    %315 = vector.broadcast %314 : vector<24x1xi1> to vector<24x32xi1>
    %316 = arith.select %315, %311, %277 : vector<24x32xi1>, vector<24x32xf32>
    %317 = vector.shape_cast %313 : vector<24x1xi1> to vector<24x1xi1>
    %318 = vector.broadcast %317 : vector<24x1xi1> to vector<24x32xi1>
    %319 = arith.select %318, %309, %280 : vector<24x32xi1>, vector<24x32xf32>
    %320 = vector.extract_strided_slice %5 {offsets = [192, 0], sizes = [24, 128], strides = [1, 1]} : vector<240x128xf32> to vector<24x128xf32>
    %321 = arith.truncf %316 : vector<24x32xf32> to vector<24x32xbf16>
    %cst_43 = arith.constant dense<0.000000e+00> : vector<24x128xf32>
    %322 = tpu.matmul %321, %2, %cst_43 {dimension_numbers = #tpu.dot_dimension_numbers<[1], [0], [0], [1], [0, 0, 1, 1], [], []>} : vector<24x32xbf16>, vector<32x128xbf16>, vector<24x128xf32> -> vector<24x128xf32>
    %323 = arith.addf %320, %322 : vector<24x128xf32>
    %324 = vector.broadcast %1 : vector<1x128xf32> to vector<24x128xf32>
    %325 = arith.addf %323, %324 : vector<24x128xf32>
    %326 = vector.extract_strided_slice %325 {offsets = [0, 0], sizes = [24, 32], strides = [1, 1]} : vector<24x128xf32> to vector<24x32xf32>
    %327 = arith.negf %326 : vector<24x32xf32>
    %328 = math.exp %327 : vector<24x32xf32>
    %cst_44 = arith.constant 1.000000e+00 : f32
    %329 = vector.broadcast %cst_44 : f32 to vector<24x32xf32>
    %330 = arith.addf %329, %328 : vector<24x32xf32>
    %331 = arith.divf %329, %330 : vector<24x32xf32>
    %332 = vector.extract_strided_slice %325 {offsets = [0, 32], sizes = [24, 32], strides = [1, 1]} : vector<24x128xf32> to vector<24x32xf32>
    %333 = arith.negf %332 : vector<24x32xf32>
    %334 = math.exp %333 : vector<24x32xf32>
    %cst_45 = arith.constant 1.000000e+00 : f32
    %335 = vector.broadcast %cst_45 : f32 to vector<24x32xf32>
    %336 = arith.addf %335, %334 : vector<24x32xf32>
    %337 = arith.divf %335, %336 : vector<24x32xf32>
    %338 = vector.extract_strided_slice %325 {offsets = [0, 64], sizes = [24, 32], strides = [1, 1]} : vector<24x128xf32> to vector<24x32xf32>
    %339 = math.tanh %338 : vector<24x32xf32>
    %340 = vector.extract_strided_slice %325 {offsets = [0, 96], sizes = [24, 32], strides = [1, 1]} : vector<24x128xf32> to vector<24x32xf32>
    %341 = arith.negf %340 : vector<24x32xf32>
    %342 = math.exp %341 : vector<24x32xf32>
    %cst_46 = arith.constant 1.000000e+00 : f32
    %343 = vector.broadcast %cst_46 : f32 to vector<24x32xf32>
    %344 = arith.addf %343, %342 : vector<24x32xf32>
    %345 = arith.divf %343, %344 : vector<24x32xf32>
    %346 = arith.mulf %337, %319 : vector<24x32xf32>
    %347 = arith.mulf %331, %339 : vector<24x32xf32>
    %348 = arith.addf %346, %347 : vector<24x32xf32>
    %349 = math.tanh %348 : vector<24x32xf32>
    %350 = arith.mulf %345, %349 : vector<24x32xf32>
    %c8_i32 = arith.constant 8 : i32
    %351 = vector.broadcast %c8_i32 : i32 to vector<24x1xi32>
    %352 = arith.cmpi sgt, %0, %351 : vector<24x1xi32>
    %353 = vector.shape_cast %352 : vector<24x1xi1> to vector<24x1xi1>
    %354 = vector.broadcast %353 : vector<24x1xi1> to vector<24x32xi1>
    %355 = arith.select %354, %350, %316 : vector<24x32xi1>, vector<24x32xf32>
    %356 = vector.shape_cast %352 : vector<24x1xi1> to vector<24x1xi1>
    %357 = vector.broadcast %356 : vector<24x1xi1> to vector<24x32xi1>
    %358 = arith.select %357, %348, %319 : vector<24x32xi1>, vector<24x32xf32>
    %359 = vector.extract_strided_slice %5 {offsets = [216, 0], sizes = [24, 128], strides = [1, 1]} : vector<240x128xf32> to vector<24x128xf32>
    %360 = arith.truncf %355 : vector<24x32xf32> to vector<24x32xbf16>
    %cst_47 = arith.constant dense<0.000000e+00> : vector<24x128xf32>
    %361 = tpu.matmul %360, %2, %cst_47 {dimension_numbers = #tpu.dot_dimension_numbers<[1], [0], [0], [1], [0, 0, 1, 1], [], []>} : vector<24x32xbf16>, vector<32x128xbf16>, vector<24x128xf32> -> vector<24x128xf32>
    %362 = arith.addf %359, %361 : vector<24x128xf32>
    %363 = vector.broadcast %1 : vector<1x128xf32> to vector<24x128xf32>
    %364 = arith.addf %362, %363 : vector<24x128xf32>
    %365 = vector.extract_strided_slice %364 {offsets = [0, 0], sizes = [24, 32], strides = [1, 1]} : vector<24x128xf32> to vector<24x32xf32>
    %366 = arith.negf %365 : vector<24x32xf32>
    %367 = math.exp %366 : vector<24x32xf32>
    %cst_48 = arith.constant 1.000000e+00 : f32
    %368 = vector.broadcast %cst_48 : f32 to vector<24x32xf32>
    %369 = arith.addf %368, %367 : vector<24x32xf32>
    %370 = arith.divf %368, %369 : vector<24x32xf32>
    %371 = vector.extract_strided_slice %364 {offsets = [0, 32], sizes = [24, 32], strides = [1, 1]} : vector<24x128xf32> to vector<24x32xf32>
    %372 = arith.negf %371 : vector<24x32xf32>
    %373 = math.exp %372 : vector<24x32xf32>
    %cst_49 = arith.constant 1.000000e+00 : f32
    %374 = vector.broadcast %cst_49 : f32 to vector<24x32xf32>
    %375 = arith.addf %374, %373 : vector<24x32xf32>
    %376 = arith.divf %374, %375 : vector<24x32xf32>
    %377 = vector.extract_strided_slice %364 {offsets = [0, 64], sizes = [24, 32], strides = [1, 1]} : vector<24x128xf32> to vector<24x32xf32>
    %378 = math.tanh %377 : vector<24x32xf32>
    %379 = vector.extract_strided_slice %364 {offsets = [0, 96], sizes = [24, 32], strides = [1, 1]} : vector<24x128xf32> to vector<24x32xf32>
    %380 = arith.negf %379 : vector<24x32xf32>
    %381 = math.exp %380 : vector<24x32xf32>
    %cst_50 = arith.constant 1.000000e+00 : f32
    %382 = vector.broadcast %cst_50 : f32 to vector<24x32xf32>
    %383 = arith.addf %382, %381 : vector<24x32xf32>
    %384 = arith.divf %382, %383 : vector<24x32xf32>
    %385 = arith.mulf %376, %358 : vector<24x32xf32>
    %386 = arith.mulf %370, %378 : vector<24x32xf32>
    %387 = arith.addf %385, %386 : vector<24x32xf32>
    %388 = math.tanh %387 : vector<24x32xf32>
    %389 = arith.mulf %384, %388 : vector<24x32xf32>
    %c9_i32 = arith.constant 9 : i32
    %390 = vector.broadcast %c9_i32 : i32 to vector<24x1xi32>
    %391 = arith.cmpi sgt, %0, %390 : vector<24x1xi32>
    %392 = vector.shape_cast %391 : vector<24x1xi1> to vector<24x1xi1>
    %393 = vector.broadcast %392 : vector<24x1xi1> to vector<24x32xi1>
    %394 = arith.select %393, %389, %355 : vector<24x32xi1>, vector<24x32xf32>
    %c0_51 = arith.constant 0 : index
    %c0_52 = arith.constant 0 : index
    %395 = vector.load %arg5[%c0_51, %c0_52] : memref<4x24xf32, #tpu.memory_space<vmem>>, vector<4x24xf32>
    %cst_53 = arith.constant dense<0.000000e+00> : vector<4x32xf32>
    %396 = tpu.matmul %395, %394, %cst_53 {dimension_numbers = #tpu.dot_dimension_numbers<[1], [0], [0], [1], [0, 0, 1, 1], [], []>} : vector<4x24xf32>, vector<24x32xf32>, vector<4x32xf32> -> vector<4x32xf32>
    %397 = arith.truncf %396 : vector<4x32xf32> to vector<4x32xbf16>
    %c0_54 = arith.constant 0 : index
    %c0_55 = arith.constant 0 : index
    %398 = vector.load %arg6[%c0_54, %c0_55] : memref<32x32xbf16, #tpu.memory_space<vmem>>, vector<32x32xbf16>
    %cst_56 = arith.constant dense<0.000000e+00> : vector<4x32xf32>
    %399 = tpu.matmul %397, %398, %cst_56 {dimension_numbers = #tpu.dot_dimension_numbers<[1], [0], [0], [1], [0, 0, 1, 1], [], []>} : vector<4x32xbf16>, vector<32x32xbf16>, vector<4x32xf32> -> vector<4x32xf32>
    %c0_57 = arith.constant 0 : index
    %c0_58 = arith.constant 0 : index
    %400 = vector.load %arg7[%c0_57, %c0_58] : memref<1x32xf32, #tpu.memory_space<vmem>>, vector<1x32xf32>
    %401 = vector.broadcast %400 : vector<1x32xf32> to vector<4x32xf32>
    %402 = arith.addf %399, %401 : vector<4x32xf32>
    %cst_59 = arith.constant 0.000000e+00 : f32
    %403 = vector.broadcast %cst_59 : f32 to vector<4x32xf32>
    %404 = arith.maximumf %402, %403 : vector<4x32xf32>
    %c0_60 = arith.constant 0 : index
    %c0_61 = arith.constant 0 : index
    %405 = vector.load %arg10[%c0_60, %c0_61] : memref<1x32xf32, #tpu.memory_space<vmem>>, vector<1x32xf32>
    %406 = vector.broadcast %405 : vector<1x32xf32> to vector<4x32xf32>
    %407 = arith.subf %404, %406 : vector<4x32xf32>
    %c0_62 = arith.constant 0 : index
    %c0_63 = arith.constant 0 : index
    %408 = vector.load %arg11[%c0_62, %c0_63] : memref<1x32xf32, #tpu.memory_space<vmem>>, vector<1x32xf32>
    %cst_64 = arith.constant 9.99999974E-6 : f32
    %409 = vector.broadcast %cst_64 : f32 to vector<1x32xf32>
    %410 = arith.addf %408, %409 : vector<1x32xf32>
    %411 = math.rsqrt %410 : vector<1x32xf32>
    %412 = vector.broadcast %411 : vector<1x32xf32> to vector<4x32xf32>
    %413 = arith.mulf %407, %412 : vector<4x32xf32>
    %c0_65 = arith.constant 0 : index
    %c0_66 = arith.constant 0 : index
    %414 = vector.load %arg8[%c0_65, %c0_66] : memref<1x32xf32, #tpu.memory_space<vmem>>, vector<1x32xf32>
    %415 = vector.broadcast %414 : vector<1x32xf32> to vector<4x32xf32>
    %416 = arith.mulf %413, %415 : vector<4x32xf32>
    %c0_67 = arith.constant 0 : index
    %c0_68 = arith.constant 0 : index
    %417 = vector.load %arg9[%c0_67, %c0_68] : memref<1x32xf32, #tpu.memory_space<vmem>>, vector<1x32xf32>
    %418 = vector.broadcast %417 : vector<1x32xf32> to vector<4x32xf32>
    %419 = arith.addf %416, %418 : vector<4x32xf32>
    %420 = arith.truncf %419 : vector<4x32xf32> to vector<4x32xbf16>
    %c0_69 = arith.constant 0 : index
    %c0_70 = arith.constant 0 : index
    %421 = vector.load %arg12[%c0_69, %c0_70] : memref<32x3xbf16, #tpu.memory_space<vmem>>, vector<32x3xbf16>
    %cst_71 = arith.constant dense<0.000000e+00> : vector<4x3xf32>
    %422 = tpu.matmul %420, %421, %cst_71 {dimension_numbers = #tpu.dot_dimension_numbers<[1], [0], [0], [1], [0, 0, 1, 1], [], []>} : vector<4x32xbf16>, vector<32x3xbf16>, vector<4x3xf32> -> vector<4x3xf32>
    %c0_72 = arith.constant 0 : index
    %c0_73 = arith.constant 0 : index
    %423 = vector.load %arg13[%c0_72, %c0_73] : memref<1x3xf32, #tpu.memory_space<vmem>>, vector<1x3xf32>
    %424 = vector.broadcast %423 : vector<1x3xf32> to vector<4x3xf32>
    %425 = arith.addf %422, %424 : vector<4x3xf32>
    %cst_74 = arith.constant dense<0xFF800000> : vector<3xf32>
    %426 = vector.multi_reduction <maximumf>, %425, %cst_74 [0] : vector<4x3xf32> to vector<3xf32>
    %427 = vector.shape_cast %426 : vector<3xf32> to vector<1x3xf32>
    %428 = vector.broadcast %427 : vector<1x3xf32> to vector<4x3xf32>
    %429 = arith.subf %425, %428 : vector<4x3xf32>
    %430 = math.exp %429 : vector<4x3xf32>
    %cst_75 = arith.constant dense<0.000000e+00> : vector<3xf32>
    %431 = vector.multi_reduction <add>, %430, %cst_75 [0] : vector<4x3xf32> to vector<3xf32>
    %432 = vector.shape_cast %431 : vector<3xf32> to vector<1x3xf32>
    %433 = vector.broadcast %432 : vector<1x3xf32> to vector<4x3xf32>
    %434 = arith.divf %430, %433 : vector<4x3xf32>
    %c0_76 = arith.constant 0 : index
    %c0_77 = arith.constant 0 : index
    %435 = vector.load %arg14[%c0_76, %c0_77] : memref<4x3xf32, #tpu.memory_space<vmem>>, vector<4x3xf32>
    tpu.vector_store %arg14[%c0_76, %c0_77], %434 {strides = array<i32>} : memref<4x3xf32, #tpu.memory_space<vmem>>, vector<4x3xf32>,
    return
  }
}

</mosaic_0001>

<llo_original>
// kernel: tpu_custom_call.1
$region0: #{tpu_custom_call.1}
  #allocation0 [shape = 'u32[]', space=smem, size = 0x4, offset = 0x4, fixed_abs, tag = 'smem constant byte address 0x4 - core index']
  #allocation1 [shape = 'u32[72,128]{1,0:T(1,128)}', space=vmem, size = 0x9000, scoped, tag = 'internal scratch']
  %s0 = inlined_call_operand.vmem [shape: bf16[240,32], index: 0, kind: input, shape index: {}]
  %s1 = inlined_call_operand.vmem [shape: s32[24,1], index: 1, kind: input, shape index: {}]
  %s2 = inlined_call_operand.vmem [shape: bf16[32,128], index: 2, kind: input, shape index: {}]
  %s3 = inlined_call_operand.vmem [shape: bf16[32,128], index: 3, kind: input, shape index: {}]
  %s4 = inlined_call_operand.vmem [shape: f32[1,128], index: 4, kind: input, shape index: {}]
  %s5 = inlined_call_operand.vmem [shape: f32[4,24], index: 5, kind: input, shape index: {}]
  %s6 = inlined_call_operand.vmem [shape: bf16[32,32], index: 6, kind: input, shape index: {}]
  %s7 = inlined_call_operand.vmem [shape: f32[1,32], index: 7, kind: input, shape index: {}]
  %s8 = inlined_call_operand.vmem [shape: f32[1,32], index: 8, kind: input, shape index: {}]
  %s9 = inlined_call_operand.vmem [shape: f32[1,32], index: 9, kind: input, shape index: {}]
  %s10 = inlined_call_operand.vmem [shape: f32[1,32], index: 10, kind: input, shape index: {}]
  %s11 = inlined_call_operand.vmem [shape: f32[1,32], index: 11, kind: input, shape index: {}]
  %s12 = inlined_call_operand.vmem [shape: bf16[32,3], index: 12, kind: input, shape index: {}]
  %s13 = inlined_call_operand.vmem [shape: f32[1,3], index: 13, kind: input, shape index: {}]
  %s14 = inlined_call_operand.hbm [shape: f32[4,3], index: 14, kind: output, shape index: {}]
  %s15 = sld [smem:[#allocation0]]
  $region66: #{tpu_custom_call.1} parent=0
    _
  %s17 = ssub.s32 1, %s15
  %s18 = scalar_select 0, %s17, %s15
  $region1: #{tpu_custom_call.1} parent=0
    #allocation2 [shape = 'u8[2048]{0}', space=vmem, size = 0x800, scoped, tag = 'output window, operand 0, single buffered']
    #allocation3 [shape = 's32[1]{0}', space=sflag, size = 0x4, scoped, tag = 'scoped memory for tpu_custom_call.1']
    %19 = vsyncpa [#allocation3], 0
    // Predicated region
    $region2: #{tpu_custom_call.1} parent=1 // pred_check
      _
    $region3: #{tpu_custom_call.1} parent=1 // pred_check_branch
      %21 = sbr.rel (0) target = $region5
    $region4: #{tpu_custom_call.1} parent=1 // pred_region
      _
    $region5: #{tpu_custom_call.1} parent=1 // pred_fallthru
      _
    // Predicated region
    $region6: #{tpu_custom_call.1} parent=1 // pred_check
      _
    $region7: #{tpu_custom_call.1} parent=1 // pred_check_branch
      %23 = sbr.rel (0) target = $region9
    $region8: #{tpu_custom_call.1} parent=1 // pred_region
      _
    $region9: #{tpu_custom_call.1} parent=1 // pred_fallthru
      _
    // Predicated region
    $region10: #{tpu_custom_call.1} parent=1 // pred_check
      _
    $region11: #{tpu_custom_call.1} parent=1 // pred_check_branch
      %25 = sbr.rel (0) target = $region13
    $region12: #{tpu_custom_call.1} parent=1 // pred_region
      _
    $region13: #{tpu_custom_call.1} parent=1 // pred_fallthru
      _
    // Predicated region
    $region14: #{tpu_custom_call.1} parent=1 // pred_check
      _
    $region15: #{tpu_custom_call.1} parent=1 // pred_check_branch
      %27 = sbr.rel (0) target = $region17
    $region16: #{tpu_custom_call.1} parent=1 // pred_region
      _
    $region17: #{tpu_custom_call.1} parent=1 // pred_fallthru
      _
    // Predicated region
    $region18: #{tpu_custom_call.1} parent=1 // pred_check
      _
    $region19: #{tpu_custom_call.1} parent=1 // pred_check_branch
      %29 = sbr.rel (0) target = $region21
    $region20: #{tpu_custom_call.1} parent=1 // pred_region
      _
    $region21: #{tpu_custom_call.1} parent=1 // pred_fallthru
      _
    // Predicated region
    $region22: #{tpu_custom_call.1} parent=1 // pred_check
      _
    $region23: #{tpu_custom_call.1} parent=1 // pred_check_branch
      %31 = sbr.rel (0) target = $region25
    $region24: #{tpu_custom_call.1} parent=1 // pred_region
      _
    $region25: #{tpu_custom_call.1} parent=1 // pred_fallthru
      _
    // Predicated region
    $region26: #{tpu_custom_call.1} parent=1 // pred_check
      _
    $region27: #{tpu_custom_call.1} parent=1 // pred_check_branch
      %33 = sbr.rel (0) target = $region29
    $region28: #{tpu_custom_call.1} parent=1 // pred_region
      _
    $region29: #{tpu_custom_call.1} parent=1 // pred_fallthru
      _
    // Predicated region
    $region30: #{tpu_custom_call.1} parent=1 // pred_check
      _
    $region31: #{tpu_custom_call.1} parent=1 // pred_check_branch
      %35 = sbr.rel (0) target = $region33
    $region32: #{tpu_custom_call.1} parent=1 // pred_region
      _
    $region33: #{tpu_custom_call.1} parent=1 // pred_fallthru
      _
    // Predicated region
    $region34: #{tpu_custom_call.1} parent=1 // pred_check
      _
    $region35: #{tpu_custom_call.1} parent=1 // pred_check_branch
      %37 = sbr.rel (0) target = $region37
    $region36: #{tpu_custom_call.1} parent=1 // pred_region
      _
    $region37: #{tpu_custom_call.1} parent=1 // pred_fallthru
      _
    // Predicated region
    $region38: #{tpu_custom_call.1} parent=1 // pred_check
      _
    $region39: #{tpu_custom_call.1} parent=1 // pred_check_branch
      %39 = sbr.rel (0) target = $region41
    $region40: #{tpu_custom_call.1} parent=1 // pred_region
      _
    $region41: #{tpu_custom_call.1} parent=1 // pred_fallthru
      _
    // Predicated region
    $region42: #{tpu_custom_call.1} parent=1 // pred_check
      _
    $region43: #{tpu_custom_call.1} parent=1 // pred_check_branch
      %41 = sbr.rel (0) target = $region45
    $region44: #{tpu_custom_call.1} parent=1 // pred_region
      _
    $region45: #{tpu_custom_call.1} parent=1 // pred_fallthru
      _
    // Predicated region
    $region46: #{tpu_custom_call.1} parent=1 // pred_check
      _
    $region47: #{tpu_custom_call.1} parent=1 // pred_check_branch
      %43 = sbr.rel (0) target = $region49
    $region48: #{tpu_custom_call.1} parent=1 // pred_region
      _
    $region49: #{tpu_custom_call.1} parent=1 // pred_fallthru
      _
    // Predicated region
    $region50: #{tpu_custom_call.1} parent=1 // pred_check
      _
    $region51: #{tpu_custom_call.1} parent=1 // pred_check_branch
      %45 = sbr.rel (0) target = $region53
    $region52: #{tpu_custom_call.1} parent=1 // pred_region
      _
    $region53: #{tpu_custom_call.1} parent=1 // pred_fallthru
      _
    // Predicated region
    $region54: #{tpu_custom_call.1} parent=1 // pred_check
      _
    $region55: #{tpu_custom_call.1} parent=1 // pred_check_branch
      %47 = sbr.rel (0) target = $region57
    $region56: #{tpu_custom_call.1} parent=1 // pred_region
      _
    $region57: #{tpu_custom_call.1} parent=1 // pred_fallthru
      _
    %v49 = vld [vmem:[%s1] sm:$0xff]
    %v50 = vld [vmem:[%s1 + $0x8] sm:$0xff]
    %v51 = vld [vmem:[%s1 + $0x10] sm:$0xff]
    %v52 = vld [vmem:[%s4] sm:$0x1]
    %v53 = vld [vmem:[%s3] sm:$0xf]
    %v54 = vld [vmem:[%s3 + $0x4] sm:$0xf]
    %v55 = vld [vmem:[%s3 + $0x8] sm:$0xf]
    %v56 = vld [vmem:[%s3 + $0xc] sm:$0xf]
    %v57 = vld [vmem:[%s0] sm:$0xf]
    %v58 = vld [vmem:[%s0 + $0x4] sm:$0xf]
    %v59 = vld [vmem:[%s0 + $0x8] sm:$0xf]
    %v60 = vld [vmem:[%s0 + $0xc] sm:$0xf]
    %v61 = vld [vmem:[%s0 + $0x10] sm:$0xf]
    %v62 = vld [vmem:[%s0 + $0x14] sm:$0xf]
    %v63 = vld [vmem:[%s0 + $0x18] sm:$0xf]
    %v64 = vld [vmem:[%s0 + $0x1c] sm:$0xf]
    %v65 = vld [vmem:[%s0 + $0x20] sm:$0xf]
    %v66 = vld [vmem:[%s0 + $0x24] sm:$0xf]
    %v67 = vld [vmem:[%s0 + $0x28] sm:$0xf]
    %v68 = vld [vmem:[%s0 + $0x2c] sm:$0xf]
    %v69 = vld [vmem:[%s0 + $0x30] sm:$0xf]
    %v70 = vld [vmem:[%s0 + $0x34] sm:$0xf]
    %v71 = vld [vmem:[%s0 + $0x38] sm:$0xf]
    %v72 = vld [vmem:[%s0 + $0x3c] sm:$0xf]
    %v73 = vld [vmem:[%s0 + $0x40] sm:$0xf]
    %v74 = vld [vmem:[%s0 + $0x44] sm:$0xf]
    %v75 = vld [vmem:[%s0 + $0x48] sm:$0xf]
    %v76 = vld [vmem:[%s0 + $0x4c] sm:$0xf]
    %v77 = vld [vmem:[%s0 + $0x50] sm:$0xf]
    %v78 = vld [vmem:[%s0 + $0x54] sm:$0xf]
    %v79 = vld [vmem:[%s0 + $0x58] sm:$0xf]
    %v80 = vld [vmem:[%s0 + $0x5c] sm:$0xf]
    %v81 = vld [vmem:[%s0 + $0x60] sm:$0xf]
    %v82 = vld [vmem:[%s0 + $0x64] sm:$0xf]
    %v83 = vld [vmem:[%s0 + $0x68] sm:$0xf]
    %v84 = vld [vmem:[%s0 + $0x6c] sm:$0xf]
    %v85 = vld [vmem:[%s0 + $0x70] sm:$0xf]
    %v86 = vld [vmem:[%s0 + $0x74] sm:$0xf]
    %v87 = vld [vmem:[%s2] sm:$0xf]
    %v88 = vld [vmem:[%s2 + $0x4] sm:$0xf]
    %v89 = vld [vmem:[%s2 + $0x8] sm:$0xf]
    %v90 = vld [vmem:[%s2 + $0xc] sm:$0xf]
    %v121 = vunpack.c.l.b16 %v57
    %v122 = vunpack.c.l.b16 %v58
    %v123 = vunpack.c.l.b16 %v59
    %v124 = vunpack.c.l.b16 %v60
    %v125 = vunpack.c.l.b16 %v61
    %v126 = vunpack.c.l.b16 %v62
    %v127 = vunpack.c.l.b16 %v63
    %v128 = vunpack.c.l.b16 %v64
    %v129 = vunpack.c.l.b16 %v65
    %v130 = vunpack.c.l.b16 %v66
    %v131 = vunpack.c.l.b16 %v67
    %v132 = vunpack.c.l.b16 %v68
    %v133 = vunpack.c.l.b16 %v69
    %v134 = vunpack.c.l.b16 %v70
    %v135 = vunpack.c.l.b16 %v71
    %v136 = vunpack.c.l.b16 %v72
    %v137 = vunpack.c.l.b16 %v73
    %v138 = vunpack.c.l.b16 %v74
    %v139 = vunpack.c.l.b16 %v75
    %v140 = vunpack.c.l.b16 %v76
    %v141 = vunpack.c.l.b16 %v77
    %v142 = vunpack.c.l.b16 %v78
    %v143 = vunpack.c.l.b16 %v79
    %v144 = vunpack.c.l.b16 %v80
    %v145 = vunpack.c.l.b16 %v81
    %v146 = vunpack.c.l.b16 %v82
    %v147 = vunpack.c.l.b16 %v83
    %v148 = vunpack.c.l.b16 %v84
    %v149 = vunpack.c.l.b16 %v85
    %v150 = vunpack.c.l.b16 %v86
    %v151 = vpack.c.b16 %v122, %v121
    %v152 = vpack.c.b16 %v124, %v123
    %v153 = vpack.c.b16 %v126, %v125
    %v154 = vpack.c.b16 %v128, %v127
    %v155 = vpack.c.b16 %v130, %v129
    %v156 = vpack.c.b16 %v132, %v131
    %v157 = vpack.c.b16 %v134, %v133
    %v158 = vpack.c.b16 %v136, %v135
    %v159 = vpack.c.b16 %v138, %v137
    %v160 = vpack.c.b16 %v140, %v139
    %v161 = vpack.c.b16 %v142, %v141
    %v162 = vpack.c.b16 %v144, %v143
    %v163 = vpack.c.b16 %v146, %v145
    %v164 = vpack.c.b16 %v148, %v147
    %v165 = vpack.c.b16 %v150, %v149
    %v170 = vunpack.c.l.b16 %v87
    %v171 = vunpack.c.l.b16 %v88
    %v172 = vunpack.c.l.b16 %v89
    %v173 = vunpack.c.l.b16 %v90
    %v174 = vpack.c.b16 %v171, %v170
    %v175 = vpack.c.b16 %v173, %v172
    %vm178 = vcmask 261120
    %v180 = vsel %vm178, %v151, 0
    %v183 = vsel %vm178, %v152, 0
    %v186 = vsel %vm178, %v153, 0
    %v189 = vsel %vm178, %v154, 0
    %v192 = vsel %vm178, %v155, 0
    %v195 = vsel %vm178, %v156, 0
    %v198 = vsel %vm178, %v157, 0
    %v201 = vsel %vm178, %v158, 0
    %v204 = vsel %vm178, %v159, 0
    %v207 = vsel %vm178, %v160, 0
    %v210 = vsel %vm178, %v161, 0
    %v213 = vsel %vm178, %v162, 0
    %v216 = vsel %vm178, %v163, 0
    %v219 = vsel %vm178, %v164, 0
    %v222 = vsel %vm178, %v165, 0
    %224 = vmatpush.bf16.msra.mxu0 0
    %225 = vmatpush.bf16.msra.mxu0 0
    %226 = vmatpush.bf16.msra.mxu0 0
    %227 = vmatpush.bf16.msra.mxu0 0
    %228 = vmatpush.bf16.msra.mxu0 0
    %229 = vmatpush.bf16.msra.mxu0 0
    %230 = vmatpush.bf16.msra.mxu0 %v175
    %231 = vmatpush.bf16.msra.mxu0 %v174
    %232 = vmatmul.bf16.gmra.mxu0 %v180
    %v233 = vpop.f32.mrf.mxu0
    %v234 = vadd.f32 0.0, %v233
    %v235 = vpop.f32.mrf.mxu0
    %v236 = vadd.f32 0.0, %v235
    %237 = vmatmul.bf16.gmra.mxu0 %v183
    %v238 = vpop.f32.mrf.mxu0
    %v239 = vadd.f32 0.0, %v238
    %v240 = vpop.f32.mrf.mxu0
    %v241 = vadd.f32 0.0, %v240
    %242 = vmatmul.bf16.gmra.mxu0 %v186
    %v243 = vpop.f32.mrf.mxu0
    %v244 = vadd.f32 0.0, %v243
    %v245 = vpop.f32.mrf.mxu0
    %v246 = vadd.f32 0.0, %v245
    %247 = vmatmul.bf16.gmra.mxu0 %v189
    %v248 = vpop.f32.mrf.mxu0
    %v249 = vadd.f32 0.0, %v248
    %v250 = vpop.f32.mrf.mxu0
    %v251 = vadd.f32 0.0, %v250
    %252 = vmatmul.bf16.gmra.mxu0 %v192
    %v253 = vpop.f32.mrf.mxu0
    %v254 = vadd.f32 0.0, %v253
    %v255 = vpop.f32.mrf.mxu0
    %v256 = vadd.f32 0.0, %v255
    %257 = vmatmul.bf16.gmra.mxu0 %v195
    %v258 = vpop.f32.mrf.mxu0
    %v259 = vadd.f32 0.0, %v258
    %v260 = vpop.f32.mrf.mxu0
    %v261 = vadd.f32 0.0, %v260
    %262 = vmatmul.bf16.gmra.mxu0 %v198
    %v263 = vpop.f32.mrf.mxu0
    %v264 = vadd.f32 0.0, %v263
    %v265 = vpop.f32.mrf.mxu0
    %v266 = vadd.f32 0.0, %v265
    %267 = vmatmul.bf16.gmra.mxu0 %v201
    %v268 = vpop.f32.mrf.mxu0
    %v269 = vadd.f32 0.0, %v268
    %v270 = vpop.f32.mrf.mxu0
    %v271 = vadd.f32 0.0, %v270
    %272 = vmatmul.bf16.gmra.mxu0 %v204
    %v273 = vpop.f32.mrf.mxu0
    %v274 = vadd.f32 0.0, %v273
    %v275 = vpop.f32.mrf.mxu0
    %v276 = vadd.f32 0.0, %v275
    %277 = vmatmul.bf16.gmra.mxu0 %v207
    %v278 = vpop.f32.mrf.mxu0
    %v279 = vadd.f32 0.0, %v278
    %v280 = vpop.f32.mrf.mxu0
    %v281 = vadd.f32 0.0, %v280
    %282 = vmatmul.bf16.gmra.mxu0 %v210
    %v283 = vpop.f32.mrf.mxu0
    %v284 = vadd.f32 0.0, %v283
    %v285 = vpop.f32.mrf.mxu0
    %v286 = vadd.f32 0.0, %v285
    %287 = vmatmul.bf16.gmra.mxu0 %v213
    %v288 = vpop.f32.mrf.mxu0
    %v289 = vadd.f32 0.0, %v288
    %v290 = vpop.f32.mrf.mxu0
    %v291 = vadd.f32 0.0, %v290
    %292 = vmatmul.bf16.gmra.mxu0 %v216
    %v293 = vpop.f32.mrf.mxu0
    %v294 = vadd.f32 0.0, %v293
    %v295 = vpop.f32.mrf.mxu0
    %v296 = vadd.f32 0.0, %v295
    %297 = vmatmul.bf16.gmra.mxu0 %v219
    %v298 = vpop.f32.mrf.mxu0
    %v299 = vadd.f32 0.0, %v298
    %v300 = vpop.f32.mrf.mxu0
    %v301 = vadd.f32 0.0, %v300
    %302 = vmatmul.bf16.gmra.mxu0 %v222
    %v303 = vpop.f32.mrf.mxu0
    %v304 = vadd.f32 0.0, %v303
    %v305 = vpop.f32.mrf.mxu0
    %v306 = vadd.f32 0.0, %v305
    %307 = vdwg.mxu0
    %v312 = vunpack.c.l.b16 %v53
    %v313 = vunpack.c.l.b16 %v54
    %v314 = vunpack.c.l.b16 %v55
    %v315 = vunpack.c.l.b16 %v56
    %v316 = vpack.c.b16 %v313, %v312
    %v317 = vpack.c.b16 %v315, %v314
    %v321 = vsel %vm178, 0, 0
    %323 = vmatpush.bf16.msra.mxu0 0
    %324 = vmatpush.bf16.msra.mxu0 0
    %325 = vmatpush.bf16.msra.mxu0 0
    %326 = vmatpush.bf16.msra.mxu0 0
    %327 = vmatpush.bf16.msra.mxu0 0
    %328 = vmatpush.bf16.msra.mxu0 0
    %329 = vmatpush.bf16.msra.mxu0 %v317
    %330 = vmatpush.bf16.msra.mxu0 %v316
    %331 = vmatmul.bf16.gmra.mxu0 %v321
    %v332 = vpop.f32.mrf.mxu0
    %v333 = vadd.f32 0.0, %v332
    %v334 = vpop.f32.mrf.mxu0
    %v335 = vadd.f32 0.0, %v334
    %336 = vmatmul.bf16.gmra.mxu0 %v321
    %v337 = vpop.f32.mrf.mxu0
    %v338 = vadd.f32 0.0, %v337
    %v339 = vpop.f32.mrf.mxu0
    %340 = vdwg.mxu0
    %v341 = vadd.f32 %v234, %v333
    %v342 = vadd.f32 %v236, %v335
    %v343 = vadd.f32 %v239, %v338
    %v345 = vperm.slane %v52, 0
    %v347 = vadd.f32 %v341, %v345
    %v348 = vadd.f32 %v342, %v345
    %v349 = vadd.f32 %v343, %v345
    %v350 = vxor.u32 %v347, 2147483648
    %v351 = vxor.u32 %v348, 2147483648
    %v352 = vxor.u32 %v349, 2147483648
    %v353 = vmul.f32 %v350, 1.442695
    %v354 = vpow.pop %v353
    %v355 = vmul.f32 %v351, 1.442695
    %v356 = vpow.pop %v355
    %v357 = vmul.f32 %v352, 1.442695
    %v358 = vpow.pop %v357
    %v359 = vadd.f32 %v354, 1.0
    %v360 = vadd.f32 %v356, 1.0
    %v361 = vadd.f32 %v358, 1.0
    %v362 = vrcp.pop %v359
    %v363 = vmul.f32 %v359, %v362
    %v364 = vsub.f32 1.0, %v363
    %v365 = vmul.f32 %v362, %v364
    %v366 = vadd.f32 %v362, %v365
    %vm367 = vweird.f32 %v359
    %vm368 = vweird.f32 %v362
    %vm369 = vmor %vm367, %vm368
    %v370 = vsel %vm369, %v362, %v366
    %v371 = vand.u32 2147483647, %v359
    %vm372 = vcmp.eq.f32.partialorder %v371, 8.507059e+37
    %v373 = vand.u32 %v359, 2147483648
    %v374 = vor.u32 1.1754944e-38, %v373
    %v375 = vsel %vm372, %v374, %v370
    %v376 = vmul.f32 1.0, %v375
    %v377 = vrcp.pop %v360
    %v378 = vmul.f32 %v360, %v377
    %v379 = vsub.f32 1.0, %v378
    %v380 = vmul.f32 %v377, %v379
    %v381 = vadd.f32 %v377, %v380
    %vm382 = vweird.f32 %v360
    %vm383 = vweird.f32 %v377
    %vm384 = vmor %vm382, %vm383
    %v385 = vsel %vm384, %v377, %v381
    %v386 = vand.u32 2147483647, %v360
    %vm387 = vcmp.eq.f32.partialorder %v386, 8.507059e+37
    %v388 = vand.u32 %v360, 2147483648
    %v389 = vor.u32 1.1754944e-38, %v388
    %v390 = vsel %vm387, %v389, %v385
    %v391 = vmul.f32 1.0, %v390
    %v392 = vrcp.pop %v361
    %v393 = vmul.f32 %v361, %v392
    %v394 = vsub.f32 1.0, %v393
    %v395 = vmul.f32 %v392, %v394
    %v396 = vadd.f32 %v392, %v395
    %vm397 = vweird.f32 %v361
    %vm398 = vweird.f32 %v392
    %vm399 = vmor %vm397, %vm398
    %v400 = vsel %vm399, %v392, %v396
    %v401 = vand.u32 2147483647, %v361
    %vm402 = vcmp.eq.f32.partialorder %v401, 8.507059e+37
    %v403 = vand.u32 %v361, 2147483648
    %v404 = vor.u32 1.1754944e-38, %v403
    %v405 = vsel %vm402, %v404, %v400
    %v406 = vmul.f32 1.0, %v405
    %v407 = vtanh.pop %v347
    %v408 = vtanh.pop %v348
    %v409 = vtanh.pop %v349
    %v410 = vmul.f32 %v376, 0.0
    %v411 = vmul.f32 %v391, 0.0
    %v412 = vmul.f32 %v406, 0.0
    %416 = vrot.lane.b32.xlu0 %v407, 64
    %v417 = vpop.permute.xlu0 %416
    %418 = vrot.lane.b32.xlu0 %v408, 64
    %v419 = vpop.permute.xlu0 %418
    %420 = vrot.lane.b32.xlu0 %v409, 64
    %v421 = vpop.permute.xlu0 %420
    %v425 = vmul.f32 %v376, %v417
    %v426 = vmul.f32 %v391, %v419
    %v427 = vmul.f32 %v406, %v421
    %431 = vrot.lane.b32.xlu0 %v425, 32
    %v432 = vpop.permute.xlu0 %431
    %433 = vrot.lane.b32.xlu0 %v426, 32
    %v434 = vpop.permute.xlu0 %433
    %435 = vrot.lane.b32.xlu0 %v427, 32
    %v436 = vpop.permute.xlu0 %435
    %v440 = vadd.f32 %v410, %v432
    %v441 = vadd.f32 %v411, %v434
    %v442 = vadd.f32 %v412, %v436
    %v443 = vtanh.pop %v440
    %v444 = vtanh.pop %v441
    %v445 = vtanh.pop %v442
    %449 = vrot.lane.b32.xlu0 %v443, 64
    %v450 = vpop.permute.xlu0 %449
    %451 = vrot.lane.b32.xlu0 %v444, 64
    %v452 = vpop.permute.xlu0 %451
    %453 = vrot.lane.b32.xlu0 %v445, 64
    %v454 = vpop.permute.xlu0 %453
    %v458 = vmul.f32 %v376, %v450
    %v459 = vmul.f32 %v391, %v452
    %v460 = vmul.f32 %v406, %v454
    %vm461 = vcmp.gt.s32.totalorder %v49, 0
    %vm462 = vcmp.gt.s32.totalorder %v50, 0
    %vm463 = vcmp.gt.s32.totalorder %v51, 0
    %v464 = vsel %vm461, 1, 0
    %v465 = vsel %vm462, 1, 0
    %v466 = vsel %vm463, 1, 0
    %467 = vset.pattern.permute.xlu0 0
    %468 = vperm.xlu0 %467, %v464
    %v469 = vpop.permute.xlu0 %468
    %470 = vset.pattern.permute.xlu0 0
    %471 = vperm.xlu0 %470, %v465
    %v472 = vpop.permute.xlu0 %471
    %473 = vset.pattern.permute.xlu0 0
    %474 = vperm.xlu0 %473, %v466
    %v475 = vpop.permute.xlu0 %474
    %vm476 = vcmp.eq.s32.totalorder %v469, 1
    %vm477 = vcmp.eq.s32.totalorder %v472, 1
    %vm478 = vcmp.eq.s32.totalorder %v475, 1
    %v479 = vsel %vm476, %v458, 0.0
    %v480 = vsel %vm477, %v459, 0.0
    %v481 = vsel %vm478, %v460, 0.0
    %v482 = vsel %vm476, %v440, 0.0
    %v483 = vsel %vm477, %v441, 0.0
    %v484 = vsel %vm478, %v442, 0.0
    %v485 = vpack.c.bf16 %v480, %v479
    %v486 = vpack.c.bf16 %v481, %v481
    %489 = vrot.lane.b32.xlu0 %v485, 32
    %v490 = vpop.permute.xlu0 %489
    %491 = vrot.lane.b32.xlu0 %v486, 32
    %v492 = vpop.permute.xlu0 %491
    %v494 = vsel %vm178, %v490, 0
    %v497 = vsel %vm178, %v492, 0
    %499 = vmatpush.bf16.msra.mxu0 0
    %500 = vmatpush.bf16.msra.mxu0 0
    %501 = vmatpush.bf16.msra.mxu0 0
    %502 = vmatpush.bf16.msra.mxu0 0
    %503 = vmatpush.bf16.msra.mxu0 0
    %504 = vmatpush.bf16.msra.mxu0 0
    %505 = vmatpush.bf16.msra.mxu0 %v317
    %506 = vmatpush.bf16.msra.mxu0 %v316
    %507 = vmatmul.bf16.gmra.mxu0 %v494
    %v508 = vpop.f32.mrf.mxu0
    %v509 = vadd.f32 0.0, %v508
    %v510 = vpop.f32.mrf.mxu0
    %v511 = vadd.f32 0.0, %v510
    %512 = vmatmul.bf16.gmra.mxu0 %v497
    %v513 = vpop.f32.mrf.mxu0
    %v514 = vadd.f32 0.0, %v513
    %v515 = vpop.f32.mrf.mxu0
    %516 = vdwg.mxu0
    %v517 = vadd.f32 %v241, %v509
    %v518 = vadd.f32 %v244, %v511
    %v519 = vadd.f32 %v246, %v514
    %v520 = vadd.f32 %v517, %v345
    %v521 = vadd.f32 %v518, %v345
    %v522 = vadd.f32 %v519, %v345
    %v523 = vxor.u32 %v520, 2147483648
    %v524 = vxor.u32 %v521, 2147483648
    %v525 = vxor.u32 %v522, 2147483648
    %v526 = vmul.f32 %v523, 1.442695
    %v527 = vpow.pop %v526
    %v528 = vmul.f32 %v524, 1.442695
    %v529 = vpow.pop %v528
    %v530 = vmul.f32 %v525, 1.442695
    %v531 = vpow.pop %v530
    %v532 = vadd.f32 %v527, 1.0
    %v533 = vadd.f32 %v529, 1.0
    %v534 = vadd.f32 %v531, 1.0
    %v535 = vrcp.pop %v532
    %v536 = vmul.f32 %v532, %v535
    %v537 = vsub.f32 1.0, %v536
    %v538 = vmul.f32 %v535, %v537
    %v539 = vadd.f32 %v535, %v538
    %vm540 = vweird.f32 %v532
    %vm541 = vweird.f32 %v535
    %vm542 = vmor %vm540, %vm541
    %v543 = vsel %vm542, %v535, %v539
    %v544 = vand.u32 2147483647, %v532
    %vm545 = vcmp.eq.f32.partialorder %v544, 8.507059e+37
    %v546 = vand.u32 %v532, 2147483648
    %v547 = vor.u32 1.1754944e-38, %v546
    %v548 = vsel %vm545, %v547, %v543
    %v549 = vmul.f32 1.0, %v548
    %v550 = vrcp.pop %v533
    %v551 = vmul.f32 %v533, %v550
    %v552 = vsub.f32 1.0, %v551
    %v553 = vmul.f32 %v550, %v552
    %v554 = vadd.f32 %v550, %v553
    %vm555 = vweird.f32 %v533
    %vm556 = vweird.f32 %v550
    %vm557 = vmor %vm555, %vm556
    %v558 = vsel %vm557, %v550, %v554
    %v559 = vand.u32 2147483647, %v533
    %vm560 = vcmp.eq.f32.partialorder %v559, 8.507059e+37
    %v561 = vand.u32 %v533, 2147483648
    %v562 = vor.u32 1.1754944e-38, %v561
    %v563 = vsel %vm560, %v562, %v558
    %v564 = vmul.f32 1.0, %v563
    %v565 = vrcp.pop %v534
    %v566 = vmul.f32 %v534, %v565
    %v567 = vsub.f32 1.0, %v566
    %v568 = vmul.f32 %v565, %v567
    %v569 = vadd.f32 %v565, %v568
    %vm570 = vweird.f32 %v534
    %vm571 = vweird.f32 %v565
    %vm572 = vmor %vm570, %vm571
    %v573 = vsel %vm572, %v565, %v569
    %v574 = vand.u32 2147483647, %v534
    %vm575 = vcmp.eq.f32.partialorder %v574, 8.507059e+37
    %v576 = vand.u32 %v534, 2147483648
    %v577 = vor.u32 1.1754944e-38, %v576
    %v578 = vsel %vm575, %v577, %v573
    %v579 = vmul.f32 1.0, %v578
    %v580 = vtanh.pop %v520
    %v581 = vtanh.pop %v521
    %v582 = vtanh.pop %v522
    %v583 = vmul.f32 %v549, %v482
    %v584 = vmul.f32 %v564, %v483
    %v585 = vmul.f32 %v579, %v484
    %589 = vrot.lane.b32.xlu0 %v580, 64
    %v590 = vpop.permute.xlu0 %589
    %591 = vrot.lane.b32.xlu0 %v581, 64
    %v592 = vpop.permute.xlu0 %591
    %593 = vrot.lane.b32.xlu0 %v582, 64
    %v594 = vpop.permute.xlu0 %593
    %v598 = vmul.f32 %v549, %v590
    %v599 = vmul.f32 %v564, %v592
    %v600 = vmul.f32 %v579, %v594
    %604 = vrot.lane.b32.xlu0 %v598, 32
    %v605 = vpop.permute.xlu0 %604
    %606 = vrot.lane.b32.xlu0 %v599, 32
    %v607 = vpop.permute.xlu0 %606
    %608 = vrot.lane.b32.xlu0 %v600, 32
    %v609 = vpop.permute.xlu0 %608
    %v613 = vadd.f32 %v583, %v605
    %v614 = vadd.f32 %v584, %v607
    %v615 = vadd.f32 %v585, %v609
    %v616 = vtanh.pop %v613
    %v617 = vtanh.pop %v614
    %v618 = vtanh.pop %v615
    %622 = vrot.lane.b32.xlu0 %v616, 64
    %v623 = vpop.permute.xlu0 %622
    %624 = vrot.lane.b32.xlu0 %v617, 64
    %v625 = vpop.permute.xlu0 %624
    %626 = vrot.lane.b32.xlu0 %v618, 64
    %v627 = vpop.permute.xlu0 %626
    %v631 = vmul.f32 %v549, %v623
    %v632 = vmul.f32 %v564, %v625
    %v633 = vmul.f32 %v579, %v627
    %vm634 = vcmp.gt.s32.totalorder %v49, 1
    %vm635 = vcmp.gt.s32.totalorder %v50, 1
    %vm636 = vcmp.gt.s32.totalorder %v51, 1
    %v637 = vsel %vm634, 1, 0
    %v638 = vsel %vm635, 1, 0
    %v639 = vsel %vm636, 1, 0
    %640 = vset.pattern.permute.xlu0 0
    %641 = vperm.xlu0 %640, %v637
    %v642 = vpop.permute.xlu0 %641
    %643 = vset.pattern.permute.xlu0 0
    %644 = vperm.xlu0 %643, %v638
    %v645 = vpop.permute.xlu0 %644
    %646 = vset.pattern.permute.xlu0 0
    %647 = vperm.xlu0 %646, %v639
    %v648 = vpop.permute.xlu0 %647
    %vm649 = vcmp.eq.s32.totalorder %v642, 1
    %vm650 = vcmp.eq.s32.totalorder %v645, 1
    %vm651 = vcmp.eq.s32.totalorder %v648, 1
    %v652 = vsel %vm649, %v631, %v479
    %v653 = vsel %vm650, %v632, %v480
    %v654 = vsel %vm651, %v633, %v481
    %v655 = vsel %vm649, %v613, %v482
    %v656 = vsel %vm650, %v614, %v483
    %v657 = vsel %vm651, %v615, %v484
    %v658 = vpack.c.bf16 %v653, %v652
    %v659 = vpack.c.bf16 %v654, %v654
    %662 = vrot.lane.b32.xlu0 %v658, 32
    %v663 = vpop.permute.xlu0 %662
    %664 = vrot.lane.b32.xlu0 %v659, 32
    %v665 = vpop.permute.xlu0 %664
    %v667 = vsel %vm178, %v663, 0
    %v670 = vsel %vm178, %v665, 0
    %672 = vmatpush.bf16.msra.mxu0 0
    %673 = vmatpush.bf16.msra.mxu0 0
    %674 = vmatpush.bf16.msra.mxu0 0
    %675 = vmatpush.bf16.msra.mxu0 0
    %676 = vmatpush.bf16.msra.mxu0 0
    %677 = vmatpush.bf16.msra.mxu0 0
    %678 = vmatpush.bf16.msra.mxu0 %v317
    %679 = vmatpush.bf16.msra.mxu0 %v316
    %680 = vmatmul.bf16.gmra.mxu0 %v667
    %v681 = vpop.f32.mrf.mxu0
    %v682 = vadd.f32 0.0, %v681
    %v683 = vpop.f32.mrf.mxu0
    %v684 = vadd.f32 0.0, %v683
    %685 = vmatmul.bf16.gmra.mxu0 %v670
    %v686 = vpop.f32.mrf.mxu0
    %v687 = vadd.f32 0.0, %v686
    %v688 = vpop.f32.mrf.mxu0
    %689 = vdwg.mxu0
    %v690 = vadd.f32 %v249, %v682
    %v691 = vadd.f32 %v251, %v684
    %v692 = vadd.f32 %v254, %v687
    %v693 = vadd.f32 %v690, %v345
    %v694 = vadd.f32 %v691, %v345
    %v695 = vadd.f32 %v692, %v345
    %v696 = vxor.u32 %v693, 2147483648
    %v697 = vxor.u32 %v694, 2147483648
    %v698 = vxor.u32 %v695, 2147483648
    %v699 = vmul.f32 %v696, 1.442695
    %v700 = vpow.pop %v699
    %v701 = vmul.f32 %v697, 1.442695
    %v702 = vpow.pop %v701
    %v703 = vmul.f32 %v698, 1.442695
    %v704 = vpow.pop %v703
    %v705 = vadd.f32 %v700, 1.0
    %v706 = vadd.f32 %v702, 1.0
    %v707 = vadd.f32 %v704, 1.0
    %v708 = vrcp.pop %v705
    %v709 = vmul.f32 %v705, %v708
    %v710 = vsub.f32 1.0, %v709
    %v711 = vmul.f32 %v708, %v710
    %v712 = vadd.f32 %v708, %v711
    %vm713 = vweird.f32 %v705
    %vm714 = vweird.f32 %v708
    %vm715 = vmor %vm713, %vm714
    %v716 = vsel %vm715, %v708, %v712
    %v717 = vand.u32 2147483647, %v705
    %vm718 = vcmp.eq.f32.partialorder %v717, 8.507059e+37
    %v719 = vand.u32 %v705, 2147483648
    %v720 = vor.u32 1.1754944e-38, %v719
    %v721 = vsel %vm718, %v720, %v716
    %v722 = vmul.f32 1.0, %v721
    %v723 = vrcp.pop %v706
    %v724 = vmul.f32 %v706, %v723
    %v725 = vsub.f32 1.0, %v724
    %v726 = vmul.f32 %v723, %v725
    %v727 = vadd.f32 %v723, %v726
    %vm728 = vweird.f32 %v706
    %vm729 = vweird.f32 %v723
    %vm730 = vmor %vm728, %vm729
    %v731 = vsel %vm730, %v723, %v727
    %v732 = vand.u32 2147483647, %v706
    %vm733 = vcmp.eq.f32.partialorder %v732, 8.507059e+37
    %v734 = vand.u32 %v706, 2147483648
    %v735 = vor.u32 1.1754944e-38, %v734
    %v736 = vsel %vm733, %v735, %v731
    %v737 = vmul.f32 1.0, %v736
    %v738 = vrcp.pop %v707
    %v739 = vmul.f32 %v707, %v738
    %v740 = vsub.f32 1.0, %v739
    %v741 = vmul.f32 %v738, %v740
    %v742 = vadd.f32 %v738, %v741
    %vm743 = vweird.f32 %v707
    %vm744 = vweird.f32 %v738
    %vm745 = vmor %vm743, %vm744
    %v746 = vsel %vm745, %v738, %v742
    %v747 = vand.u32 2147483647, %v707
    %vm748 = vcmp.eq.f32.partialorder %v747, 8.507059e+37
    %v749 = vand.u32 %v707, 2147483648
    %v750 = vor.u32 1.1754944e-38, %v749
    %v751 = vsel %vm748, %v750, %v746
    %v752 = vmul.f32 1.0, %v751
    %v753 = vtanh.pop %v693
    %v754 = vtanh.pop %v694
    %v755 = vtanh.pop %v695
    %v756 = vmul.f32 %v722, %v655
    %v757 = vmul.f32 %v737, %v656
    %v758 = vmul.f32 %v752, %v657
    %762 = vrot.lane.b32.xlu0 %v753, 64
    %v763 = vpop.permute.xlu0 %762
    %764 = vrot.lane.b32.xlu0 %v754, 64
    %v765 = vpop.permute.xlu0 %764
    %766 = vrot.lane.b32.xlu0 %v755, 64
    %v767 = vpop.permute.xlu0 %766
    %v771 = vmul.f32 %v722, %v763
    %v772 = vmul.f32 %v737, %v765
    %v773 = vmul.f32 %v752, %v767
    %777 = vrot.lane.b32.xlu0 %v771, 32
    %v778 = vpop.permute.xlu0 %777
    %779 = vrot.lane.b32.xlu0 %v772, 32
    %v780 = vpop.permute.xlu0 %779
    %781 = vrot.lane.b32.xlu0 %v773, 32
    %v782 = vpop.permute.xlu0 %781
    %v786 = vadd.f32 %v756, %v778
    %v787 = vadd.f32 %v757, %v780
    %v788 = vadd.f32 %v758, %v782
    %v789 = vtanh.pop %v786
    %v790 = vtanh.pop %v787
    %v791 = vtanh.pop %v788
    %795 = vrot.lane.b32.xlu0 %v789, 64
    %v796 = vpop.permute.xlu0 %795
    %797 = vrot.lane.b32.xlu0 %v790, 64
    %v798 = vpop.permute.xlu0 %797
    %799 = vrot.lane.b32.xlu0 %v791, 64
    %v800 = vpop.permute.xlu0 %799
    %v804 = vmul.f32 %v722, %v796
    %v805 = vmul.f32 %v737, %v798
    %v806 = vmul.f32 %v752, %v800
    %vm807 = vcmp.gt.s32.totalorder %v49, 2
    %vm808 = vcmp.gt.s32.totalorder %v50, 2
    %vm809 = vcmp.gt.s32.totalorder %v51, 2
    %v810 = vsel %vm807, 1, 0
    %v811 = vsel %vm808, 1, 0
    %v812 = vsel %vm809, 1, 0
    %813 = vset.pattern.permute.xlu0 0
    %814 = vperm.xlu0 %813, %v810
    %v815 = vpop.permute.xlu0 %814
    %816 = vset.pattern.permute.xlu0 0
    %817 = vperm.xlu0 %816, %v811
    %v818 = vpop.permute.xlu0 %817
    %819 = vset.pattern.permute.xlu0 0
    %820 = vperm.xlu0 %819, %v812
    %v821 = vpop.permute.xlu0 %820
    %vm822 = vcmp.eq.s32.totalorder %v815, 1
    %vm823 = vcmp.eq.s32.totalorder %v818, 1
    %vm824 = vcmp.eq.s32.totalorder %v821, 1
    %v825 = vsel %vm822, %v804, %v652
    %v826 = vsel %vm823, %v805, %v653
    %v827 = vsel %vm824, %v806, %v654
    %v828 = vsel %vm822, %v786, %v655
    %v829 = vsel %vm823, %v787, %v656
    %v830 = vsel %vm824, %v788, %v657
    %v831 = vpack.c.bf16 %v826, %v825
    %v832 = vpack.c.bf16 %v827, %v827
    %835 = vrot.lane.b32.xlu0 %v831, 32
    %v836 = vpop.permute.xlu0 %835
    %837 = vrot.lane.b32.xlu0 %v832, 32
    %v838 = vpop.permute.xlu0 %837
    %v840 = vsel %vm178, %v836, 0
    %v843 = vsel %vm178, %v838, 0
    %845 = vmatpush.bf16.msra.mxu0 0
    %846 = vmatpush.bf16.msra.mxu0 0
    %847 = vmatpush.bf16.msra.mxu0 0
    %848 = vmatpush.bf16.msra.mxu0 0
    %849 = vmatpush.bf16.msra.mxu0 0
    %850 = vmatpush.bf16.msra.mxu0 0
    %851 = vmatpush.bf16.msra.mxu0 %v317
    %852 = vmatpush.bf16.msra.mxu0 %v316
    %853 = vmatmul.bf16.gmra.mxu0 %v840
    %v854 = vpop.f32.mrf.mxu0
    %v855 = vadd.f32 0.0, %v854
    %v856 = vpop.f32.mrf.mxu0
    %v857 = vadd.f32 0.0, %v856
    %858 = vmatmul.bf16.gmra.mxu0 %v843
    %v859 = vpop.f32.mrf.mxu0
    %v860 = vadd.f32 0.0, %v859
    %v861 = vpop.f32.mrf.mxu0
    %862 = vdwg.mxu0
    %v863 = vadd.f32 %v256, %v855
    %v864 = vadd.f32 %v259, %v857
    %v865 = vadd.f32 %v261, %v860
    %v866 = vadd.f32 %v863, %v345
    %v867 = vadd.f32 %v864, %v345
    %v868 = vadd.f32 %v865, %v345
    %v869 = vxor.u32 %v866, 2147483648
    %v870 = vxor.u32 %v867, 2147483648
    %v871 = vxor.u32 %v868, 2147483648
    %v872 = vmul.f32 %v869, 1.442695
    %v873 = vpow.pop %v872
    %v874 = vmul.f32 %v870, 1.442695
    %v875 = vpow.pop %v874
    %v876 = vmul.f32 %v871, 1.442695
    %v877 = vpow.pop %v876
    %v878 = vadd.f32 %v873, 1.0
    %v879 = vadd.f32 %v875, 1.0
    %v880 = vadd.f32 %v877, 1.0
    %v881 = vrcp.pop %v878
    %v882 = vmul.f32 %v878, %v881
    %v883 = vsub.f32 1.0, %v882
    %v884 = vmul.f32 %v881, %v883
    %v885 = vadd.f32 %v881, %v884
    %vm886 = vweird.f32 %v878
    %vm887 = vweird.f32 %v881
    %vm888 = vmor %vm886, %vm887
    %v889 = vsel %vm888, %v881, %v885
    %v890 = vand.u32 2147483647, %v878
    %vm891 = vcmp.eq.f32.partialorder %v890, 8.507059e+37
    %v892 = vand.u32 %v878, 2147483648
    %v893 = vor.u32 1.1754944e-38, %v892
    %v894 = vsel %vm891, %v893, %v889
    %v895 = vmul.f32 1.0, %v894
    %v896 = vrcp.pop %v879
    %v897 = vmul.f32 %v879, %v896
    %v898 = vsub.f32 1.0, %v897
    %v899 = vmul.f32 %v896, %v898
    %v900 = vadd.f32 %v896, %v899
    %vm901 = vweird.f32 %v879
    %vm902 = vweird.f32 %v896
    %vm903 = vmor %vm901, %vm902
    %v904 = vsel %vm903, %v896, %v900
    %v905 = vand.u32 2147483647, %v879
    %vm906 = vcmp.eq.f32.partialorder %v905, 8.507059e+37
    %v907 = vand.u32 %v879, 2147483648
    %v908 = vor.u32 1.1754944e-38, %v907
    %v909 = vsel %vm906, %v908, %v904
    %v910 = vmul.f32 1.0, %v909
    %v911 = vrcp.pop %v880
    %v912 = vmul.f32 %v880, %v911
    %v913 = vsub.f32 1.0, %v912
    %v914 = vmul.f32 %v911, %v913
    %v915 = vadd.f32 %v911, %v914
    %vm916 = vweird.f32 %v880
    %vm917 = vweird.f32 %v911
    %vm918 = vmor %vm916, %vm917
    %v919 = vsel %vm918, %v911, %v915
    %v920 = vand.u32 2147483647, %v880
    %vm921 = vcmp.eq.f32.partialorder %v920, 8.507059e+37
    %v922 = vand.u32 %v880, 2147483648
    %v923 = vor.u32 1.1754944e-38, %v922
    %v924 = vsel %vm921, %v923, %v919
    %v925 = vmul.f32 1.0, %v924
    %v926 = vtanh.pop %v866
    %v927 = vtanh.pop %v867
    %v928 = vtanh.pop %v868
    %v929 = vmul.f32 %v895, %v828
    %v930 = vmul.f32 %v910, %v829
    %v931 = vmul.f32 %v925, %v830
    %935 = vrot.lane.b32.xlu0 %v926, 64
    %v936 = vpop.permute.xlu0 %935
    %937 = vrot.lane.b32.xlu0 %v927, 64
    %v938 = vpop.permute.xlu0 %937
    %939 = vrot.lane.b32.xlu0 %v928, 64
    %v940 = vpop.permute.xlu0 %939
    %v944 = vmul.f32 %v895, %v936
    %v945 = vmul.f32 %v910, %v938
    %v946 = vmul.f32 %v925, %v940
    %950 = vrot.lane.b32.xlu0 %v944, 32
    %v951 = vpop.permute.xlu0 %950
    %952 = vrot.lane.b32.xlu0 %v945, 32
    %v953 = vpop.permute.xlu0 %952
    %954 = vrot.lane.b32.xlu0 %v946, 32
    %v955 = vpop.permute.xlu0 %954
    %v959 = vadd.f32 %v929, %v951
    %v960 = vadd.f32 %v930, %v953
    %v961 = vadd.f32 %v931, %v955
    %v962 = vtanh.pop %v959
    %v963 = vtanh.pop %v960
    %v964 = vtanh.pop %v961
    %968 = vrot.lane.b32.xlu0 %v962, 64
    %v969 = vpop.permute.xlu0 %968
    %970 = vrot.lane.b32.xlu0 %v963, 64
    %v971 = vpop.permute.xlu0 %970
    %972 = vrot.lane.b32.xlu0 %v964, 64
    %v973 = vpop.permute.xlu0 %972
    %v977 = vmul.f32 %v895, %v969
    %v978 = vmul.f32 %v910, %v971
    %v979 = vmul.f32 %v925, %v973
    %vm980 = vcmp.gt.s32.totalorder %v49, 3
    %vm981 = vcmp.gt.s32.totalorder %v50, 3
    %vm982 = vcmp.gt.s32.totalorder %v51, 3
    %v983 = vsel %vm980, 1, 0
    %v984 = vsel %vm981, 1, 0
    %v985 = vsel %vm982, 1, 0
    %986 = vset.pattern.permute.xlu0 0
    %987 = vperm.xlu0 %986, %v983
    %v988 = vpop.permute.xlu0 %987
    %989 = vset.pattern.permute.xlu0 0
    %990 = vperm.xlu0 %989, %v984
    %v991 = vpop.permute.xlu0 %990
    %992 = vset.pattern.permute.xlu0 0
    %993 = vperm.xlu0 %992, %v985
    %v994 = vpop.permute.xlu0 %993
    %vm995 = vcmp.eq.s32.totalorder %v988, 1
    %vm996 = vcmp.eq.s32.totalorder %v991, 1
    %vm997 = vcmp.eq.s32.totalorder %v994, 1
    %v998 = vsel %vm995, %v977, %v825
    %v999 = vsel %vm996, %v978, %v826
    %v1000 = vsel %vm997, %v979, %v827
    %v1001 = vsel %vm995, %v959, %v828
    %v1002 = vsel %vm996, %v960, %v829
    %v1003 = vsel %vm997, %v961, %v830
    %v1004 = vpack.c.bf16 %v999, %v998
    %v1005 = vpack.c.bf16 %v1000, %v1000
    %1008 = vrot.lane.b32.xlu0 %v1004, 32
    %v1009 = vpop.permute.xlu0 %1008
    %1010 = vrot.lane.b32.xlu0 %v1005, 32
    %v1011 = vpop.permute.xlu0 %1010
    %v1013 = vsel %vm178, %v1009, 0
    %v1016 = vsel %vm178, %v1011, 0
    %1018 = vmatpush.bf16.msra.mxu0 0
    %1019 = vmatpush.bf16.msra.mxu0 0
    %1020 = vmatpush.bf16.msra.mxu0 0
    %1021 = vmatpush.bf16.msra.mxu0 0
    %1022 = vmatpush.bf16.msra.mxu0 0
    %1023 = vmatpush.bf16.msra.mxu0 0
    %1024 = vmatpush.bf16.msra.mxu0 %v317
    %1025 = vmatpush.bf16.msra.mxu0 %v316
    %1026 = vmatmul.bf16.gmra.mxu0 %v1013
    %v1027 = vpop.f32.mrf.mxu0
    %v1028 = vadd.f32 0.0, %v1027
    %v1029 = vpop.f32.mrf.mxu0
    %v1030 = vadd.f32 0.0, %v1029
    %1031 = vmatmul.bf16.gmra.mxu0 %v1016
    %v1032 = vpop.f32.mrf.mxu0
    %v1033 = vadd.f32 0.0, %v1032
    %v1034 = vpop.f32.mrf.mxu0
    %1035 = vdwg.mxu0
    %v1036 = vadd.f32 %v264, %v1028
    %v1037 = vadd.f32 %v266, %v1030
    %v1038 = vadd.f32 %v269, %v1033
    %v1039 = vadd.f32 %v1036, %v345
    %v1040 = vadd.f32 %v1037, %v345
    %v1041 = vadd.f32 %v1038, %v345
    %v1042 = vxor.u32 %v1039, 2147483648
    %v1043 = vxor.u32 %v1040, 2147483648
    %v1044 = vxor.u32 %v1041, 2147483648
    %v1045 = vmul.f32 %v1042, 1.442695
    %v1046 = vpow.pop %v1045
    %v1047 = vmul.f32 %v1043, 1.442695
    %v1048 = vpow.pop %v1047
    %v1049 = vmul.f32 %v1044, 1.442695
    %v1050 = vpow.pop %v1049
    %v1051 = vadd.f32 %v1046, 1.0
    %v1052 = vadd.f32 %v1048, 1.0
    %v1053 = vadd.f32 %v1050, 1.0
    %v1054 = vrcp.pop %v1051
    %v1055 = vmul.f32 %v1051, %v1054
    %v1056 = vsub.f32 1.0, %v1055
    %v1057 = vmul.f32 %v1054, %v1056
    %v1058 = vadd.f32 %v1054, %v1057
    %vm1059 = vweird.f32 %v1051
    %vm1060 = vweird.f32 %v1054
    %vm1061 = vmor %vm1059, %vm1060
    %v1062 = vsel %vm1061, %v1054, %v1058
    %v1063 = vand.u32 2147483647, %v1051
    %vm1064 = vcmp.eq.f32.partialorder %v1063, 8.507059e+37
    %v1065 = vand.u32 %v1051, 2147483648
    %v1066 = vor.u32 1.1754944e-38, %v1065
    %v1067 = vsel %vm1064, %v1066, %v1062
    %v1068 = vmul.f32 1.0, %v1067
    %v1069 = vrcp.pop %v1052
    %v1070 = vmul.f32 %v1052, %v1069
    %v1071 = vsub.f32 1.0, %v1070
    %v1072 = vmul.f32 %v1069, %v1071
    %v1073 = vadd.f32 %v1069, %v1072
    %vm1074 = vweird.f32 %v1052
    %vm1075 = vweird.f32 %v1069
    %vm1076 = vmor %vm1074, %vm1075
    %v1077 = vsel %vm1076, %v1069, %v1073
    %v1078 = vand.u32 2147483647, %v1052
    %vm1079 = vcmp.eq.f32.partialorder %v1078, 8.507059e+37
    %v1080 = vand.u32 %v1052, 2147483648
    %v1081 = vor.u32 1.1754944e-38, %v1080
    %v1082 = vsel %vm1079, %v1081, %v1077
    %v1083 = vmul.f32 1.0, %v1082
    %v1084 = vrcp.pop %v1053
    %v1085 = vmul.f32 %v1053, %v1084
    %v1086 = vsub.f32 1.0, %v1085
    %v1087 = vmul.f32 %v1084, %v1086
    %v1088 = vadd.f32 %v1084, %v1087
    %vm1089 = vweird.f32 %v1053
    %vm1090 = vweird.f32 %v1084
    %vm1091 = vmor %vm1089, %vm1090
    %v1092 = vsel %vm1091, %v1084, %v1088
    %v1093 = vand.u32 2147483647, %v1053
    %vm1094 = vcmp.eq.f32.partialorder %v1093, 8.507059e+37
    %v1095 = vand.u32 %v1053, 2147483648
    %v1096 = vor.u32 1.1754944e-38, %v1095
    %v1097 = vsel %vm1094, %v1096, %v1092
    %v1098 = vmul.f32 1.0, %v1097
    %v1099 = vtanh.pop %v1039
    %v1100 = vtanh.pop %v1040
    %v1101 = vtanh.pop %v1041
    %v1102 = vmul.f32 %v1068, %v1001
    %v1103 = vmul.f32 %v1083, %v1002
    %v1104 = vmul.f32 %v1098, %v1003
    %1108 = vrot.lane.b32.xlu0 %v1099, 64
    %v1109 = vpop.permute.xlu0 %1108
    %1110 = vrot.lane.b32.xlu0 %v1100, 64
    %v1111 = vpop.permute.xlu0 %1110
    %1112 = vrot.lane.b32.xlu0 %v1101, 64
    %v1113 = vpop.permute.xlu0 %1112
    %v1117 = vmul.f32 %v1068, %v1109
    %v1118 = vmul.f32 %v1083, %v1111
    %v1119 = vmul.f32 %v1098, %v1113
    %1123 = vrot.lane.b32.xlu0 %v1117, 32
    %v1124 = vpop.permute.xlu0 %1123
    %1125 = vrot.lane.b32.xlu0 %v1118, 32
    %v1126 = vpop.permute.xlu0 %1125
    %1127 = vrot.lane.b32.xlu0 %v1119, 32
    %v1128 = vpop.permute.xlu0 %1127
    %v1132 = vadd.f32 %v1102, %v1124
    %v1133 = vadd.f32 %v1103, %v1126
    %v1134 = vadd.f32 %v1104, %v1128
    %v1135 = vtanh.pop %v1132
    %v1136 = vtanh.pop %v1133
    %v1137 = vtanh.pop %v1134
    %1141 = vrot.lane.b32.xlu0 %v1135, 64
    %v1142 = vpop.permute.xlu0 %1141
    %1143 = vrot.lane.b32.xlu0 %v1136, 64
    %v1144 = vpop.permute.xlu0 %1143
    %1145 = vrot.lane.b32.xlu0 %v1137, 64
    %v1146 = vpop.permute.xlu0 %1145
    %v1150 = vmul.f32 %v1068, %v1142
    %v1151 = vmul.f32 %v1083, %v1144
    %v1152 = vmul.f32 %v1098, %v1146
    %vm1153 = vcmp.gt.s32.totalorder %v49, 4
    %vm1154 = vcmp.gt.s32.totalorder %v50, 4
    %vm1155 = vcmp.gt.s32.totalorder %v51, 4
    %v1156 = vsel %vm1153, 1, 0
    %v1157 = vsel %vm1154, 1, 0
    %v1158 = vsel %vm1155, 1, 0
    %1159 = vset.pattern.permute.xlu0 0
    %1160 = vperm.xlu0 %1159, %v1156
    %v1161 = vpop.permute.xlu0 %1160
    %1162 = vset.pattern.permute.xlu0 0
    %1163 = vperm.xlu0 %1162, %v1157
    %v1164 = vpop.permute.xlu0 %1163
    %1165 = vset.pattern.permute.xlu0 0
    %1166 = vperm.xlu0 %1165, %v1158
    %v1167 = vpop.permute.xlu0 %1166
    %vm1168 = vcmp.eq.s32.totalorder %v1161, 1
    %vm1169 = vcmp.eq.s32.totalorder %v1164, 1
    %vm1170 = vcmp.eq.s32.totalorder %v1167, 1
    %v1171 = vsel %vm1168, %v1150, %v998
    %v1172 = vsel %vm1169, %v1151, %v999
    %v1173 = vsel %vm1170, %v1152, %v1000
    %v1174 = vsel %vm1168, %v1132, %v1001
    %v1175 = vsel %vm1169, %v1133, %v1002
    %v1176 = vsel %vm1170, %v1134, %v1003
    %v1177 = vpack.c.bf16 %v1172, %v1171
    %v1178 = vpack.c.bf16 %v1173, %v1173
    %1181 = vrot.lane.b32.xlu0 %v1177, 32
    %v1182 = vpop.permute.xlu0 %1181
    %1183 = vrot.lane.b32.xlu0 %v1178, 32
    %v1184 = vpop.permute.xlu0 %1183
    %v1186 = vsel %vm178, %v1182, 0
    %v1189 = vsel %vm178, %v1184, 0
    %1191 = vmatpush.bf16.msra.mxu0 0
    %1192 = vmatpush.bf16.msra.mxu0 0
    %1193 = vmatpush.bf16.msra.mxu0 0
    %1194 = vmatpush.bf16.msra.mxu0 0
    %1195 = vmatpush.bf16.msra.mxu0 0
    %1196 = vmatpush.bf16.msra.mxu0 0
    %1197 = vmatpush.bf16.msra.mxu0 %v317
    %1198 = vmatpush.bf16.msra.mxu0 %v316
    %1199 = vmatmul.bf16.gmra.mxu0 %v1186
    %v1200 = vpop.f32.mrf.mxu0
    %v1201 = vadd.f32 0.0, %v1200
    %v1202 = vpop.f32.mrf.mxu0
    %v1203 = vadd.f32 0.0, %v1202
    %1204 = vmatmul.bf16.gmra.mxu0 %v1189
    %v1205 = vpop.f32.mrf.mxu0
    %v1206 = vadd.f32 0.0, %v1205
    %v1207 = vpop.f32.mrf.mxu0
    %1208 = vdwg.mxu0
    %v1209 = vadd.f32 %v271, %v1201
    %v1210 = vadd.f32 %v274, %v1203
    %v1211 = vadd.f32 %v276, %v1206
    %v1212 = vadd.f32 %v1209, %v345
    %v1213 = vadd.f32 %v1210, %v345
    %v1214 = vadd.f32 %v1211, %v345
    %v1215 = vxor.u32 %v1212, 2147483648
    %v1216 = vxor.u32 %v1213, 2147483648
    %v1217 = vxor.u32 %v1214, 2147483648
    %v1218 = vmul.f32 %v1215, 1.442695
    %v1219 = vpow.pop %v1218
    %v1220 = vmul.f32 %v1216, 1.442695
    %v1221 = vpow.pop %v1220
    %v1222 = vmul.f32 %v1217, 1.442695
    %v1223 = vpow.pop %v1222
    %v1224 = vadd.f32 %v1219, 1.0
    %v1225 = vadd.f32 %v1221, 1.0
    %v1226 = vadd.f32 %v1223, 1.0
    %v1227 = vrcp.pop %v1224
    %v1228 = vmul.f32 %v1224, %v1227
    %v1229 = vsub.f32 1.0, %v1228
    %v1230 = vmul.f32 %v1227, %v1229
    %v1231 = vadd.f32 %v1227, %v1230
    %vm1232 = vweird.f32 %v1224
    %vm1233 = vweird.f32 %v1227
    %vm1234 = vmor %vm1232, %vm1233
    %v1235 = vsel %vm1234, %v1227, %v1231
    %v1236 = vand.u32 2147483647, %v1224
    %vm1237 = vcmp.eq.f32.partialorder %v1236, 8.507059e+37
    %v1238 = vand.u32 %v1224, 2147483648
    %v1239 = vor.u32 1.1754944e-38, %v1238
    %v1240 = vsel %vm1237, %v1239, %v1235
    %v1241 = vmul.f32 1.0, %v1240
    %v1242 = vrcp.pop %v1225
    %v1243 = vmul.f32 %v1225, %v1242
    %v1244 = vsub.f32 1.0, %v1243
    %v1245 = vmul.f32 %v1242, %v1244
    %v1246 = vadd.f32 %v1242, %v1245
    %vm1247 = vweird.f32 %v1225
    %vm1248 = vweird.f32 %v1242
    %vm1249 = vmor %vm1247, %vm1248
    %v1250 = vsel %vm1249, %v1242, %v1246
    %v1251 = vand.u32 2147483647, %v1225
    %vm1252 = vcmp.eq.f32.partialorder %v1251, 8.507059e+37
    %v1253 = vand.u32 %v1225, 2147483648
    %v1254 = vor.u32 1.1754944e-38, %v1253
    %v1255 = vsel %vm1252, %v1254, %v1250
    %v1256 = vmul.f32 1.0, %v1255
    %v1257 = vrcp.pop %v1226
    %v1258 = vmul.f32 %v1226, %v1257
    %v1259 = vsub.f32 1.0, %v1258
    %v1260 = vmul.f32 %v1257, %v1259
    %v1261 = vadd.f32 %v1257, %v1260
    %vm1262 = vweird.f32 %v1226
    %vm1263 = vweird.f32 %v1257
    %vm1264 = vmor %vm1262, %vm1263
    %v1265 = vsel %vm1264, %v1257, %v1261
    %v1266 = vand.u32 2147483647, %v1226
    %vm1267 = vcmp.eq.f32.partialorder %v1266, 8.507059e+37
    %v1268 = vand.u32 %v1226, 2147483648
    %v1269 = vor.u32 1.1754944e-38, %v1268
    %v1270 = vsel %vm1267, %v1269, %v1265
    %v1271 = vmul.f32 1.0, %v1270
    %v1272 = vtanh.pop %v1212
    %v1273 = vtanh.pop %v1213
    %v1274 = vtanh.pop %v1214
    %v1275 = vmul.f32 %v1241, %v1174
    %v1276 = vmul.f32 %v1256, %v1175
    %v1277 = vmul.f32 %v1271, %v1176
    %1281 = vrot.lane.b32.xlu0 %v1272, 64
    %v1282 = vpop.permute.xlu0 %1281
    %1283 = vrot.lane.b32.xlu0 %v1273, 64
    %v1284 = vpop.permute.xlu0 %1283
    %1285 = vrot.lane.b32.xlu0 %v1274, 64
    %v1286 = vpop.permute.xlu0 %1285
    %v1290 = vmul.f32 %v1241, %v1282
    %v1291 = vmul.f32 %v1256, %v1284
    %v1292 = vmul.f32 %v1271, %v1286
    %1296 = vrot.lane.b32.xlu0 %v1290, 32
    %v1297 = vpop.permute.xlu0 %1296
    %1298 = vrot.lane.b32.xlu0 %v1291, 32
    %v1299 = vpop.permute.xlu0 %1298
    %1300 = vrot.lane.b32.xlu0 %v1292, 32
    %v1301 = vpop.permute.xlu0 %1300
    %v1305 = vadd.f32 %v1275, %v1297
    %v1306 = vadd.f32 %v1276, %v1299
    %v1307 = vadd.f32 %v1277, %v1301
    %v1308 = vtanh.pop %v1305
    %v1309 = vtanh.pop %v1306
    %v1310 = vtanh.pop %v1307
    %1314 = vrot.lane.b32.xlu0 %v1308, 64
    %v1315 = vpop.permute.xlu0 %1314
    %1316 = vrot.lane.b32.xlu0 %v1309, 64
    %v1317 = vpop.permute.xlu0 %1316
    %1318 = vrot.lane.b32.xlu0 %v1310, 64
    %v1319 = vpop.permute.xlu0 %1318
    %v1323 = vmul.f32 %v1241, %v1315
    %v1324 = vmul.f32 %v1256, %v1317
    %v1325 = vmul.f32 %v1271, %v1319
    %vm1326 = vcmp.gt.s32.totalorder %v49, 5
    %vm1327 = vcmp.gt.s32.totalorder %v50, 5
    %vm1328 = vcmp.gt.s32.totalorder %v51, 5
    %v1329 = vsel %vm1326, 1, 0
    %v1330 = vsel %vm1327, 1, 0
    %v1331 = vsel %vm1328, 1, 0
    %1332 = vset.pattern.permute.xlu0 0
    %1333 = vperm.xlu0 %1332, %v1329
    %v1334 = vpop.permute.xlu0 %1333
    %1335 = vset.pattern.permute.xlu0 0
    %1336 = vperm.xlu0 %1335, %v1330
    %v1337 = vpop.permute.xlu0 %1336
    %1338 = vset.pattern.permute.xlu0 0
    %1339 = vperm.xlu0 %1338, %v1331
    %v1340 = vpop.permute.xlu0 %1339
    %vm1341 = vcmp.eq.s32.totalorder %v1334, 1
    %vm1342 = vcmp.eq.s32.totalorder %v1337, 1
    %vm1343 = vcmp.eq.s32.totalorder %v1340, 1
    %v1344 = vsel %vm1341, %v1323, %v1171
    %v1345 = vsel %vm1342, %v1324, %v1172
    %v1346 = vsel %vm1343, %v1325, %v1173
    %v1347 = vsel %vm1341, %v1305, %v1174
    %v1348 = vsel %vm1342, %v1306, %v1175
    %v1349 = vsel %vm1343, %v1307, %v1176
    %v1350 = vpack.c.bf16 %v1345, %v1344
    %v1351 = vpack.c.bf16 %v1346, %v1346
    %1354 = vrot.lane.b32.xlu0 %v1350, 32
    %v1355 = vpop.permute.xlu0 %1354
    %1356 = vrot.lane.b32.xlu0 %v1351, 32
    %v1357 = vpop.permute.xlu0 %1356
    %v1359 = vsel %vm178, %v1355, 0
    %v1362 = vsel %vm178, %v1357, 0
    %1364 = vmatpush.bf16.msra.mxu0 0
    %1365 = vmatpush.bf16.msra.mxu0 0
    %1366 = vmatpush.bf16.msra.mxu0 0
    %1367 = vmatpush.bf16.msra.mxu0 0
    %1368 = vmatpush.bf16.msra.mxu0 0
    %1369 = vmatpush.bf16.msra.mxu0 0
    %1370 = vmatpush.bf16.msra.mxu0 %v317
    %1371 = vmatpush.bf16.msra.mxu0 %v316
    %1372 = vmatmul.bf16.gmra.mxu0 %v1359
    %v1373 = vpop.f32.mrf.mxu0
    %v1374 = vadd.f32 0.0, %v1373
    %v1375 = vpop.f32.mrf.mxu0
    %v1376 = vadd.f32 0.0, %v1375
    %1377 = vmatmul.bf16.gmra.mxu0 %v1362
    %v1378 = vpop.f32.mrf.mxu0
    %v1379 = vadd.f32 0.0, %v1378
    %v1380 = vpop.f32.mrf.mxu0
    %1381 = vdwg.mxu0
    %v1382 = vadd.f32 %v279, %v1374
    %v1383 = vadd.f32 %v281, %v1376
    %v1384 = vadd.f32 %v284, %v1379
    %v1385 = vadd.f32 %v1382, %v345
    %v1386 = vadd.f32 %v1383, %v345
    %v1387 = vadd.f32 %v1384, %v345
    %v1388 = vxor.u32 %v1385, 2147483648
    %v1389 = vxor.u32 %v1386, 2147483648
    %v1390 = vxor.u32 %v1387, 2147483648
    %v1391 = vmul.f32 %v1388, 1.442695
    %v1392 = vpow.pop %v1391
    %v1393 = vmul.f32 %v1389, 1.442695
    %v1394 = vpow.pop %v1393
    %v1395 = vmul.f32 %v1390, 1.442695
    %v1396 = vpow.pop %v1395
    %v1397 = vadd.f32 %v1392, 1.0
    %v1398 = vadd.f32 %v1394, 1.0
    %v1399 = vadd.f32 %v1396, 1.0
    %v1400 = vrcp.pop %v1397
    %v1401 = vmul.f32 %v1397, %v1400
    %v1402 = vsub.f32 1.0, %v1401
    %v1403 = vmul.f32 %v1400, %v1402
    %v1404 = vadd.f32 %v1400, %v1403
    %vm1405 = vweird.f32 %v1397
    %vm1406 = vweird.f32 %v1400
    %vm1407 = vmor %vm1405, %vm1406
    %v1408 = vsel %vm1407, %v1400, %v1404
    %v1409 = vand.u32 2147483647, %v1397
    %vm1410 = vcmp.eq.f32.partialorder %v1409, 8.507059e+37
    %v1411 = vand.u32 %v1397, 2147483648
    %v1412 = vor.u32 1.1754944e-38, %v1411
    %v1413 = vsel %vm1410, %v1412, %v1408
    %v1414 = vmul.f32 1.0, %v1413
    %v1415 = vrcp.pop %v1398
    %v1416 = vmul.f32 %v1398, %v1415
    %v1417 = vsub.f32 1.0, %v1416
    %v1418 = vmul.f32 %v1415, %v1417
    %v1419 = vadd.f32 %v1415, %v1418
    %vm1420 = vweird.f32 %v1398
    %vm1421 = vweird.f32 %v1415
    %vm1422 = vmor %vm1420, %vm1421
    %v1423 = vsel %vm1422, %v1415, %v1419
    %v1424 = vand.u32 2147483647, %v1398
    %vm1425 = vcmp.eq.f32.partialorder %v1424, 8.507059e+37
    %v1426 = vand.u32 %v1398, 2147483648
    %v1427 = vor.u32 1.1754944e-38, %v1426
    %v1428 = vsel %vm1425, %v1427, %v1423
    %v1429 = vmul.f32 1.0, %v1428
    %v1430 = vrcp.pop %v1399
    %v1431 = vmul.f32 %v1399, %v1430
    %v1432 = vsub.f32 1.0, %v1431
    %v1433 = vmul.f32 %v1430, %v1432
    %v1434 = vadd.f32 %v1430, %v1433
    %vm1435 = vweird.f32 %v1399
    %vm1436 = vweird.f32 %v1430
    %vm1437 = vmor %vm1435, %vm1436
    %v1438 = vsel %vm1437, %v1430, %v1434
    %v1439 = vand.u32 2147483647, %v1399
    %vm1440 = vcmp.eq.f32.partialorder %v1439, 8.507059e+37
    %v1441 = vand.u32 %v1399, 2147483648
    %v1442 = vor.u32 1.1754944e-38, %v1441
    %v1443 = vsel %vm1440, %v1442, %v1438
    %v1444 = vmul.f32 1.0, %v1443
    %v1445 = vtanh.pop %v1385
    %v1446 = vtanh.pop %v1386
    %v1447 = vtanh.pop %v1387
    %v1448 = vmul.f32 %v1414, %v1347
    %v1449 = vmul.f32 %v1429, %v1348
    %v1450 = vmul.f32 %v1444, %v1349
    %1454 = vrot.lane.b32.xlu0 %v1445, 64
    %v1455 = vpop.permute.xlu0 %1454
    %1456 = vrot.lane.b32.xlu0 %v1446, 64
    %v1457 = vpop.permute.xlu0 %1456
    %1458 = vrot.lane.b32.xlu0 %v1447, 64
    %v1459 = vpop.permute.xlu0 %1458
    %v1463 = vmul.f32 %v1414, %v1455
    %v1464 = vmul.f32 %v1429, %v1457
    %v1465 = vmul.f32 %v1444, %v1459
    %1469 = vrot.lane.b32.xlu0 %v1463, 32
    %v1470 = vpop.permute.xlu0 %1469
    %1471 = vrot.lane.b32.xlu0 %v1464, 32
    %v1472 = vpop.permute.xlu0 %1471
    %1473 = vrot.lane.b32.xlu0 %v1465, 32
    %v1474 = vpop.permute.xlu0 %1473
    %v1478 = vadd.f32 %v1448, %v1470
    %v1479 = vadd.f32 %v1449, %v1472
    %v1480 = vadd.f32 %v1450, %v1474
    %v1481 = vtanh.pop %v1478
    %v1482 = vtanh.pop %v1479
    %v1483 = vtanh.pop %v1480
    %1487 = vrot.lane.b32.xlu0 %v1481, 64
    %v1488 = vpop.permute.xlu0 %1487
    %1489 = vrot.lane.b32.xlu0 %v1482, 64
    %v1490 = vpop.permute.xlu0 %1489
    %1491 = vrot.lane.b32.xlu0 %v1483, 64
    %v1492 = vpop.permute.xlu0 %1491
    %v1496 = vmul.f32 %v1414, %v1488
    %v1497 = vmul.f32 %v1429, %v1490
    %v1498 = vmul.f32 %v1444, %v1492
    %vm1499 = vcmp.gt.s32.totalorder %v49, 6
    %vm1500 = vcmp.gt.s32.totalorder %v50, 6
    %vm1501 = vcmp.gt.s32.totalorder %v51, 6
    %v1502 = vsel %vm1499, 1, 0
    %v1503 = vsel %vm1500, 1, 0
    %v1504 = vsel %vm1501, 1, 0
    %1505 = vset.pattern.permute.xlu0 0
    %1506 = vperm.xlu0 %1505, %v1502
    %v1507 = vpop.permute.xlu0 %1506
    %1508 = vset.pattern.permute.xlu0 0
    %1509 = vperm.xlu0 %1508, %v1503
    %v1510 = vpop.permute.xlu0 %1509
    %1511 = vset.pattern.permute.xlu0 0
    %1512 = vperm.xlu0 %1511, %v1504
    %v1513 = vpop.permute.xlu0 %1512
    %vm1514 = vcmp.eq.s32.totalorder %v1507, 1
    %vm1515 = vcmp.eq.s32.totalorder %v1510, 1
    %vm1516 = vcmp.eq.s32.totalorder %v1513, 1
    %v1517 = vsel %vm1514, %v1496, %v1344
    %v1518 = vsel %vm1515, %v1497, %v1345
    %v1519 = vsel %vm1516, %v1498, %v1346
    %v1520 = vsel %vm1514, %v1478, %v1347
    %v1521 = vsel %vm1515, %v1479, %v1348
    %v1522 = vsel %vm1516, %v1480, %v1349
    %v1523 = vpack.c.bf16 %v1518, %v1517
    %v1524 = vpack.c.bf16 %v1519, %v1519
    %1527 = vrot.lane.b32.xlu0 %v1523, 32
    %v1528 = vpop.permute.xlu0 %1527
    %1529 = vrot.lane.b32.xlu0 %v1524, 32
    %v1530 = vpop.permute.xlu0 %1529
    %v1532 = vsel %vm178, %v1528, 0
    %v1535 = vsel %vm178, %v1530, 0
    %1537 = vmatpush.bf16.msra.mxu0 0
    %1538 = vmatpush.bf16.msra.mxu0 0
    %1539 = vmatpush.bf16.msra.mxu0 0
    %1540 = vmatpush.bf16.msra.mxu0 0
    %1541 = vmatpush.bf16.msra.mxu0 0
    %1542 = vmatpush.bf16.msra.mxu0 0
    %1543 = vmatpush.bf16.msra.mxu0 %v317
    %1544 = vmatpush.bf16.msra.mxu0 %v316
    %1545 = vmatmul.bf16.gmra.mxu0 %v1532
    %v1546 = vpop.f32.mrf.mxu0
    %v1547 = vadd.f32 0.0, %v1546
    %v1548 = vpop.f32.mrf.mxu0
    %v1549 = vadd.f32 0.0, %v1548
    %1550 = vmatmul.bf16.gmra.mxu0 %v1535
    %v1551 = vpop.f32.mrf.mxu0
    %v1552 = vadd.f32 0.0, %v1551
    %v1553 = vpop.f32.mrf.mxu0
    %1554 = vdwg.mxu0
    %v1555 = vadd.f32 %v286, %v1547
    %v1556 = vadd.f32 %v289, %v1549
    %v1557 = vadd.f32 %v291, %v1552
    %v1558 = vadd.f32 %v1555, %v345
    %v1559 = vadd.f32 %v1556, %v345
    %v1560 = vadd.f32 %v1557, %v345
    %v1561 = vxor.u32 %v1558, 2147483648
    %v1562 = vxor.u32 %v1559, 2147483648
    %v1563 = vxor.u32 %v1560, 2147483648
    %v1564 = vmul.f32 %v1561, 1.442695
    %v1565 = vpow.pop %v1564
    %v1566 = vmul.f32 %v1562, 1.442695
    %v1567 = vpow.pop %v1566
    %v1568 = vmul.f32 %v1563, 1.442695
    %v1569 = vpow.pop %v1568
    %v1570 = vadd.f32 %v1565, 1.0
    %v1571 = vadd.f32 %v1567, 1.0
    %v1572 = vadd.f32 %v1569, 1.0
    %v1573 = vrcp.pop %v1570
    %v1574 = vmul.f32 %v1570, %v1573
    %v1575 = vsub.f32 1.0, %v1574
    %v1576 = vmul.f32 %v1573, %v1575
    %v1577 = vadd.f32 %v1573, %v1576
    %vm1578 = vweird.f32 %v1570
    %vm1579 = vweird.f32 %v1573
    %vm1580 = vmor %vm1578, %vm1579
    %v1581 = vsel %vm1580, %v1573, %v1577
    %v1582 = vand.u32 2147483647, %v1570
    %vm1583 = vcmp.eq.f32.partialorder %v1582, 8.507059e+37
    %v1584 = vand.u32 %v1570, 2147483648
    %v1585 = vor.u32 1.1754944e-38, %v1584
    %v1586 = vsel %vm1583, %v1585, %v1581
    %v1587 = vmul.f32 1.0, %v1586
    %v1588 = vrcp.pop %v1571
    %v1589 = vmul.f32 %v1571, %v1588
    %v1590 = vsub.f32 1.0, %v1589
    %v1591 = vmul.f32 %v1588, %v1590
    %v1592 = vadd.f32 %v1588, %v1591
    %vm1593 = vweird.f32 %v1571
    %vm1594 = vweird.f32 %v1588
    %vm1595 = vmor %vm1593, %vm1594
    %v1596 = vsel %vm1595, %v1588, %v1592
    %v1597 = vand.u32 2147483647, %v1571
    %vm1598 = vcmp.eq.f32.partialorder %v1597, 8.507059e+37
    %v1599 = vand.u32 %v1571, 2147483648
    %v1600 = vor.u32 1.1754944e-38, %v1599
    %v1601 = vsel %vm1598, %v1600, %v1596
    %v1602 = vmul.f32 1.0, %v1601
    %v1603 = vrcp.pop %v1572
    %v1604 = vmul.f32 %v1572, %v1603
    %v1605 = vsub.f32 1.0, %v1604
    %v1606 = vmul.f32 %v1603, %v1605
    %v1607 = vadd.f32 %v1603, %v1606
    %vm1608 = vweird.f32 %v1572
    %vm1609 = vweird.f32 %v1603
    %vm1610 = vmor %vm1608, %vm1609
    %v1611 = vsel %vm1610, %v1603, %v1607
    %v1612 = vand.u32 2147483647, %v1572
    %vm1613 = vcmp.eq.f32.partialorder %v1612, 8.507059e+37
    %v1614 = vand.u32 %v1572, 2147483648
    %v1615 = vor.u32 1.1754944e-38, %v1614
    %v1616 = vsel %vm1613, %v1615, %v1611
    %v1617 = vmul.f32 1.0, %v1616
    %v1618 = vtanh.pop %v1558
    %v1619 = vtanh.pop %v1559
    %v1620 = vtanh.pop %v1560
    %v1621 = vmul.f32 %v1587, %v1520
    %v1622 = vmul.f32 %v1602, %v1521
    %v1623 = vmul.f32 %v1617, %v1522
    %1627 = vrot.lane.b32.xlu0 %v1618, 64
    %v1628 = vpop.permute.xlu0 %1627
    %1629 = vrot.lane.b32.xlu0 %v1619, 64
    %v1630 = vpop.permute.xlu0 %1629
    %1631 = vrot.lane.b32.xlu0 %v1620, 64
    %v1632 = vpop.permute.xlu0 %1631
    %v1636 = vmul.f32 %v1587, %v1628
    %v1637 = vmul.f32 %v1602, %v1630
    %v1638 = vmul.f32 %v1617, %v1632
    %1642 = vrot.lane.b32.xlu0 %v1636, 32
    %v1643 = vpop.permute.xlu0 %1642
    %1644 = vrot.lane.b32.xlu0 %v1637, 32
    %v1645 = vpop.permute.xlu0 %1644
    %1646 = vrot.lane.b32.xlu0 %v1638, 32
    %v1647 = vpop.permute.xlu0 %1646
    %v1651 = vadd.f32 %v1621, %v1643
    %v1652 = vadd.f32 %v1622, %v1645
    %v1653 = vadd.f32 %v1623, %v1647
    %v1654 = vtanh.pop %v1651
    %v1655 = vtanh.pop %v1652
    %v1656 = vtanh.pop %v1653
    %1660 = vrot.lane.b32.xlu0 %v1654, 64
    %v1661 = vpop.permute.xlu0 %1660
    %1662 = vrot.lane.b32.xlu0 %v1655, 64
    %v1663 = vpop.permute.xlu0 %1662
    %1664 = vrot.lane.b32.xlu0 %v1656, 64
    %v1665 = vpop.permute.xlu0 %1664
    %v1669 = vmul.f32 %v1587, %v1661
    %v1670 = vmul.f32 %v1602, %v1663
    %v1671 = vmul.f32 %v1617, %v1665
    %vm1672 = vcmp.gt.s32.totalorder %v49, 7
    %vm1673 = vcmp.gt.s32.totalorder %v50, 7
    %vm1674 = vcmp.gt.s32.totalorder %v51, 7
    %v1675 = vsel %vm1672, 1, 0
    %v1676 = vsel %vm1673, 1, 0
    %v1677 = vsel %vm1674, 1, 0
    %1678 = vset.pattern.permute.xlu0 0
    %1679 = vperm.xlu0 %1678, %v1675
    %v1680 = vpop.permute.xlu0 %1679
    %1681 = vset.pattern.permute.xlu0 0
    %1682 = vperm.xlu0 %1681, %v1676
    %v1683 = vpop.permute.xlu0 %1682
    %1684 = vset.pattern.permute.xlu0 0
    %1685 = vperm.xlu0 %1684, %v1677
    %v1686 = vpop.permute.xlu0 %1685
    %vm1687 = vcmp.eq.s32.totalorder %v1680, 1
    %vm1688 = vcmp.eq.s32.totalorder %v1683, 1
    %vm1689 = vcmp.eq.s32.totalorder %v1686, 1
    %v1690 = vsel %vm1687, %v1669, %v1517
    %v1691 = vsel %vm1688, %v1670, %v1518
    %v1692 = vsel %vm1689, %v1671, %v1519
    %v1693 = vsel %vm1687, %v1651, %v1520
    %v1694 = vsel %vm1688, %v1652, %v1521
    %v1695 = vsel %vm1689, %v1653, %v1522
    %v1696 = vpack.c.bf16 %v1691, %v1690
    %v1697 = vpack.c.bf16 %v1692, %v1692
    %1700 = vrot.lane.b32.xlu0 %v1696, 32
    %v1701 = vpop.permute.xlu0 %1700
    %1702 = vrot.lane.b32.xlu0 %v1697, 32
    %v1703 = vpop.permute.xlu0 %1702
    %v1705 = vsel %vm178, %v1701, 0
    %v1708 = vsel %vm178, %v1703, 0
    %1710 = vmatpush.bf16.msra.mxu0 0
    %1711 = vmatpush.bf16.msra.mxu0 0
    %1712 = vmatpush.bf16.msra.mxu0 0
    %1713 = vmatpush.bf16.msra.mxu0 0
    %1714 = vmatpush.bf16.msra.mxu0 0
    %1715 = vmatpush.bf16.msra.mxu0 0
    %1716 = vmatpush.bf16.msra.mxu0 %v317
    %1717 = vmatpush.bf16.msra.mxu0 %v316
    %1718 = vmatmul.bf16.gmra.mxu0 %v1705
    %v1719 = vpop.f32.mrf.mxu0
    %v1720 = vadd.f32 0.0, %v1719
    %v1721 = vpop.f32.mrf.mxu0
    %v1722 = vadd.f32 0.0, %v1721
    %1723 = vmatmul.bf16.gmra.mxu0 %v1708
    %v1724 = vpop.f32.mrf.mxu0
    %v1725 = vadd.f32 0.0, %v1724
    %v1726 = vpop.f32.mrf.mxu0
    %1727 = vdwg.mxu0
    %v1728 = vadd.f32 %v294, %v1720
    %v1729 = vadd.f32 %v296, %v1722
    %v1730 = vadd.f32 %v299, %v1725
    %v1731 = vadd.f32 %v1728, %v345
    %v1732 = vadd.f32 %v1729, %v345
    %v1733 = vadd.f32 %v1730, %v345
    %v1734 = vxor.u32 %v1731, 2147483648
    %v1735 = vxor.u32 %v1732, 2147483648
    %v1736 = vxor.u32 %v1733, 2147483648
    %v1737 = vmul.f32 %v1734, 1.442695
    %v1738 = vpow.pop %v1737
    %v1739 = vmul.f32 %v1735, 1.442695
    %v1740 = vpow.pop %v1739
    %v1741 = vmul.f32 %v1736, 1.442695
    %v1742 = vpow.pop %v1741
    %v1743 = vadd.f32 %v1738, 1.0
    %v1744 = vadd.f32 %v1740, 1.0
    %v1745 = vadd.f32 %v1742, 1.0
    %v1746 = vrcp.pop %v1743
    %v1747 = vmul.f32 %v1743, %v1746
    %v1748 = vsub.f32 1.0, %v1747
    %v1749 = vmul.f32 %v1746, %v1748
    %v1750 = vadd.f32 %v1746, %v1749
    %vm1751 = vweird.f32 %v1743
    %vm1752 = vweird.f32 %v1746
    %vm1753 = vmor %vm1751, %vm1752
    %v1754 = vsel %vm1753, %v1746, %v1750
    %v1755 = vand.u32 2147483647, %v1743
    %vm1756 = vcmp.eq.f32.partialorder %v1755, 8.507059e+37
    %v1757 = vand.u32 %v1743, 2147483648
    %v1758 = vor.u32 1.1754944e-38, %v1757
    %v1759 = vsel %vm1756, %v1758, %v1754
    %v1760 = vmul.f32 1.0, %v1759
    %v1761 = vrcp.pop %v1744
    %v1762 = vmul.f32 %v1744, %v1761
    %v1763 = vsub.f32 1.0, %v1762
    %v1764 = vmul.f32 %v1761, %v1763
    %v1765 = vadd.f32 %v1761, %v1764
    %vm1766 = vweird.f32 %v1744
    %vm1767 = vweird.f32 %v1761
    %vm1768 = vmor %vm1766, %vm1767
    %v1769 = vsel %vm1768, %v1761, %v1765
    %v1770 = vand.u32 2147483647, %v1744
    %vm1771 = vcmp.eq.f32.partialorder %v1770, 8.507059e+37
    %v1772 = vand.u32 %v1744, 2147483648
    %v1773 = vor.u32 1.1754944e-38, %v1772
    %v1774 = vsel %vm1771, %v1773, %v1769
    %v1775 = vmul.f32 1.0, %v1774
    %v1776 = vrcp.pop %v1745
    %v1777 = vmul.f32 %v1745, %v1776
    %v1778 = vsub.f32 1.0, %v1777
    %v1779 = vmul.f32 %v1776, %v1778
    %v1780 = vadd.f32 %v1776, %v1779
    %vm1781 = vweird.f32 %v1745
    %vm1782 = vweird.f32 %v1776
    %vm1783 = vmor %vm1781, %vm1782
    %v1784 = vsel %vm1783, %v1776, %v1780
    %v1785 = vand.u32 2147483647, %v1745
    %vm1786 = vcmp.eq.f32.partialorder %v1785, 8.507059e+37
    %v1787 = vand.u32 %v1745, 2147483648
    %v1788 = vor.u32 1.1754944e-38, %v1787
    %v1789 = vsel %vm1786, %v1788, %v1784
    %v1790 = vmul.f32 1.0, %v1789
    %v1791 = vtanh.pop %v1731
    %v1792 = vtanh.pop %v1732
    %v1793 = vtanh.pop %v1733
    %v1794 = vmul.f32 %v1760, %v1693
    %v1795 = vmul.f32 %v1775, %v1694
    %v1796 = vmul.f32 %v1790, %v1695
    %1800 = vrot.lane.b32.xlu0 %v1791, 64
    %v1801 = vpop.permute.xlu0 %1800
    %1802 = vrot.lane.b32.xlu0 %v1792, 64
    %v1803 = vpop.permute.xlu0 %1802
    %1804 = vrot.lane.b32.xlu0 %v1793, 64
    %v1805 = vpop.permute.xlu0 %1804
    %v1809 = vmul.f32 %v1760, %v1801
    %v1810 = vmul.f32 %v1775, %v1803
    %v1811 = vmul.f32 %v1790, %v1805
    %1815 = vrot.lane.b32.xlu0 %v1809, 32
    %v1816 = vpop.permute.xlu0 %1815
    %1817 = vrot.lane.b32.xlu0 %v1810, 32
    %v1818 = vpop.permute.xlu0 %1817
    %1819 = vrot.lane.b32.xlu0 %v1811, 32
    %v1820 = vpop.permute.xlu0 %1819
    %v1824 = vadd.f32 %v1794, %v1816
    %v1825 = vadd.f32 %v1795, %v1818
    %v1826 = vadd.f32 %v1796, %v1820
    %v1827 = vtanh.pop %v1824
    %v1828 = vtanh.pop %v1825
    %v1829 = vtanh.pop %v1826
    %1833 = vrot.lane.b32.xlu0 %v1827, 64
    %v1834 = vpop.permute.xlu0 %1833
    %1835 = vrot.lane.b32.xlu0 %v1828, 64
    %v1836 = vpop.permute.xlu0 %1835
    %1837 = vrot.lane.b32.xlu0 %v1829, 64
    %v1838 = vpop.permute.xlu0 %1837
    %v1842 = vmul.f32 %v1760, %v1834
    %v1843 = vmul.f32 %v1775, %v1836
    %v1844 = vmul.f32 %v1790, %v1838
    %vm1845 = vcmp.gt.s32.totalorder %v49, 8
    %vm1846 = vcmp.gt.s32.totalorder %v50, 8
    %vm1847 = vcmp.gt.s32.totalorder %v51, 8
    %v1848 = vsel %vm1845, 1, 0
    %v1849 = vsel %vm1846, 1, 0
    %v1850 = vsel %vm1847, 1, 0
    %1851 = vset.pattern.permute.xlu0 0
    %1852 = vperm.xlu0 %1851, %v1848
    %v1853 = vpop.permute.xlu0 %1852
    %1854 = vset.pattern.permute.xlu0 0
    %1855 = vperm.xlu0 %1854, %v1849
    %v1856 = vpop.permute.xlu0 %1855
    %1857 = vset.pattern.permute.xlu0 0
    %1858 = vperm.xlu0 %1857, %v1850
    %v1859 = vpop.permute.xlu0 %1858
    %vm1860 = vcmp.eq.s32.totalorder %v1853, 1
    %vm1861 = vcmp.eq.s32.totalorder %v1856, 1
    %vm1862 = vcmp.eq.s32.totalorder %v1859, 1
    %v1863 = vsel %vm1860, %v1842, %v1690
    %v1864 = vsel %vm1861, %v1843, %v1691
    %v1865 = vsel %vm1862, %v1844, %v1692
    %v1866 = vsel %vm1860, %v1824, %v1693
    %v1867 = vsel %vm1861, %v1825, %v1694
    %v1868 = vsel %vm1862, %v1826, %v1695
    %v1869 = vpack.c.bf16 %v1864, %v1863
    %v1870 = vpack.c.bf16 %v1865, %v1865
    %1873 = vrot.lane.b32.xlu0 %v1869, 32
    %v1874 = vpop.permute.xlu0 %1873
    %1875 = vrot.lane.b32.xlu0 %v1870, 32
    %v1876 = vpop.permute.xlu0 %1875
    %v1878 = vsel %vm178, %v1874, 0
    %v1881 = vsel %vm178, %v1876, 0
    %1883 = vmatpush.bf16.msra.mxu0 0
    %1884 = vmatpush.bf16.msra.mxu0 0
    %1885 = vmatpush.bf16.msra.mxu0 0
    %1886 = vmatpush.bf16.msra.mxu0 0
    %1887 = vmatpush.bf16.msra.mxu0 0
    %1888 = vmatpush.bf16.msra.mxu0 0
    %1889 = vmatpush.bf16.msra.mxu0 %v317
    %1890 = vmatpush.bf16.msra.mxu0 %v316
    %1891 = vmatmul.bf16.gmra.mxu0 %v1878
    %v1892 = vpop.f32.mrf.mxu0
    %v1893 = vadd.f32 0.0, %v1892
    %v1894 = vpop.f32.mrf.mxu0
    %v1895 = vadd.f32 0.0, %v1894
    %1896 = vmatmul.bf16.gmra.mxu0 %v1881
    %v1897 = vpop.f32.mrf.mxu0
    %v1898 = vadd.f32 0.0, %v1897
    %v1899 = vpop.f32.mrf.mxu0
    %1900 = vdwg.mxu0
    %v1901 = vadd.f32 %v301, %v1893
    %v1902 = vadd.f32 %v304, %v1895
    %v1903 = vadd.f32 %v306, %v1898
    %v1904 = vadd.f32 %v1901, %v345
    %v1905 = vadd.f32 %v1902, %v345
    %v1906 = vadd.f32 %v1903, %v345
    %v1907 = vxor.u32 %v1904, 2147483648
    %v1908 = vxor.u32 %v1905, 2147483648
    %v1909 = vxor.u32 %v1906, 2147483648
    %v1910 = vmul.f32 %v1907, 1.442695
    %v1911 = vpow.pop %v1910
    %v1912 = vmul.f32 %v1908, 1.442695
    %v1913 = vpow.pop %v1912
    %v1914 = vmul.f32 %v1909, 1.442695
    %v1915 = vpow.pop %v1914
    %v1916 = vadd.f32 %v1911, 1.0
    %v1917 = vadd.f32 %v1913, 1.0
    %v1918 = vadd.f32 %v1915, 1.0
    %v1919 = vrcp.pop %v1916
    %v1920 = vmul.f32 %v1916, %v1919
    %v1921 = vsub.f32 1.0, %v1920
    %v1922 = vmul.f32 %v1919, %v1921
    %v1923 = vadd.f32 %v1919, %v1922
    %vm1924 = vweird.f32 %v1916
    %vm1925 = vweird.f32 %v1919
    %vm1926 = vmor %vm1924, %vm1925
    %v1927 = vsel %vm1926, %v1919, %v1923
    %v1928 = vand.u32 2147483647, %v1916
    %vm1929 = vcmp.eq.f32.partialorder %v1928, 8.507059e+37
    %v1930 = vand.u32 %v1916, 2147483648
    %v1931 = vor.u32 1.1754944e-38, %v1930
    %v1932 = vsel %vm1929, %v1931, %v1927
    %v1933 = vmul.f32 1.0, %v1932
    %v1934 = vrcp.pop %v1917
    %v1935 = vmul.f32 %v1917, %v1934
    %v1936 = vsub.f32 1.0, %v1935
    %v1937 = vmul.f32 %v1934, %v1936
    %v1938 = vadd.f32 %v1934, %v1937
    %vm1939 = vweird.f32 %v1917
    %vm1940 = vweird.f32 %v1934
    %vm1941 = vmor %vm1939, %vm1940
    %v1942 = vsel %vm1941, %v1934, %v1938
    %v1943 = vand.u32 2147483647, %v1917
    %vm1944 = vcmp.eq.f32.partialorder %v1943, 8.507059e+37
    %v1945 = vand.u32 %v1917, 2147483648
    %v1946 = vor.u32 1.1754944e-38, %v1945
    %v1947 = vsel %vm1944, %v1946, %v1942
    %v1948 = vmul.f32 1.0, %v1947
    %v1949 = vrcp.pop %v1918
    %v1950 = vmul.f32 %v1918, %v1949
    %v1951 = vsub.f32 1.0, %v1950
    %v1952 = vmul.f32 %v1949, %v1951
    %v1953 = vadd.f32 %v1949, %v1952
    %vm1954 = vweird.f32 %v1918
    %vm1955 = vweird.f32 %v1949
    %vm1956 = vmor %vm1954, %vm1955
    %v1957 = vsel %vm1956, %v1949, %v1953
    %v1958 = vand.u32 2147483647, %v1918
    %vm1959 = vcmp.eq.f32.partialorder %v1958, 8.507059e+37
    %v1960 = vand.u32 %v1918, 2147483648
    %v1961 = vor.u32 1.1754944e-38, %v1960
    %v1962 = vsel %vm1959, %v1961, %v1957
    %v1963 = vmul.f32 1.0, %v1962
    %v1964 = vtanh.pop %v1904
    %v1965 = vtanh.pop %v1905
    %v1966 = vtanh.pop %v1906
    %v1967 = vmul.f32 %v1933, %v1866
    %v1968 = vmul.f32 %v1948, %v1867
    %v1969 = vmul.f32 %v1963, %v1868
    %1973 = vrot.lane.b32.xlu0 %v1964, 64
    %v1974 = vpop.permute.xlu0 %1973
    %1975 = vrot.lane.b32.xlu0 %v1965, 64
    %v1976 = vpop.permute.xlu0 %1975
    %1977 = vrot.lane.b32.xlu0 %v1966, 64
    %v1978 = vpop.permute.xlu0 %1977
    %v1982 = vmul.f32 %v1933, %v1974
    %v1983 = vmul.f32 %v1948, %v1976
    %v1984 = vmul.f32 %v1963, %v1978
    %1988 = vrot.lane.b32.xlu0 %v1982, 32
    %v1989 = vpop.permute.xlu0 %1988
    %1990 = vrot.lane.b32.xlu0 %v1983, 32
    %v1991 = vpop.permute.xlu0 %1990
    %1992 = vrot.lane.b32.xlu0 %v1984, 32
    %v1993 = vpop.permute.xlu0 %1992
    %v1997 = vadd.f32 %v1967, %v1989
    %v1998 = vadd.f32 %v1968, %v1991
    %v1999 = vadd.f32 %v1969, %v1993
    %v2000 = vtanh.pop %v1997
    %v2001 = vtanh.pop %v1998
    %v2002 = vtanh.pop %v1999
    %2006 = vrot.lane.b32.xlu0 %v2000, 64
    %v2007 = vpop.permute.xlu0 %2006
    %2008 = vrot.lane.b32.xlu0 %v2001, 64
    %v2009 = vpop.permute.xlu0 %2008
    %2010 = vrot.lane.b32.xlu0 %v2002, 64
    %v2011 = vpop.permute.xlu0 %2010
    %v2015 = vmul.f32 %v1933, %v2007
    %v2016 = vmul.f32 %v1948, %v2009
    %v2017 = vmul.f32 %v1963, %v2011
    %vm2018 = vcmp.gt.s32.totalorder %v49, 9
    %vm2019 = vcmp.gt.s32.totalorder %v50, 9
    %vm2020 = vcmp.gt.s32.totalorder %v51, 9
    %v2021 = vsel %vm2018, 1, 0
    %v2022 = vsel %vm2019, 1, 0
    %v2023 = vsel %vm2020, 1, 0
    %2024 = vset.pattern.permute.xlu0 0
    %2025 = vperm.xlu0 %2024, %v2021
    %v2026 = vpop.permute.xlu0 %2025
    %2027 = vset.pattern.permute.xlu0 0
    %2028 = vperm.xlu0 %2027, %v2022
    %v2029 = vpop.permute.xlu0 %2028
    %2030 = vset.pattern.permute.xlu0 0
    %2031 = vperm.xlu0 %2030, %v2023
    %v2032 = vpop.permute.xlu0 %2031
    %vm2033 = vcmp.eq.s32.totalorder %v2026, 1
    %vm2034 = vcmp.eq.s32.totalorder %v2029, 1
    %vm2035 = vcmp.eq.s32.totalorder %v2032, 1
    %v2036 = vsel %vm2033, %v2015, %v1863
    %v2037 = vsel %vm2034, %v2016, %v1864
    %v2038 = vsel %vm2035, %v2017, %v1865
    %v2039 = vld [vmem:[%s5] sm:$0xf]
    %2043 = vrot.lane.b32.xlu0 %v2036, 32
    %v2044 = vpop.permute.xlu0 %2043
    %2045 = vrot.lane.b32.xlu0 %v2037, 32
    %v2046 = vpop.permute.xlu0 %2045
    %2047 = vrot.lane.b32.xlu0 %v2038, 32
    %v2048 = vpop.permute.xlu0 %2047
    %vm2052 = vcmask 195584
    %v2054 = vsel %vm2052, %v2039, 0
    %2056 = vmatpush.msra.mxu0 0.0
    %2057 = vmatpush.msra.mxu0 0.0
    %2058 = vmatpush.msra.mxu0 0.0
    %2059 = vmatpush.msra.mxu0 0.0
    %2060 = vmatpush.msra.mxu0 0.0
    %2061 = vmatpush.msra.mxu0 0.0
    %2062 = vmatpush.msra.mxu0 0.0
    %2063 = vmatpush.msra.mxu0 0.0
    %2064 = vmatpush.msra.mxu0 0.0
    %2065 = vmatpush.msra.mxu0 0.0
    %2066 = vmatpush.msra.mxu0 0.0
    %2067 = vmatpush.msra.mxu0 0.0
    %2068 = vmatpush.msra.mxu0 0.0
    %2069 = vmatpush.msra.mxu0 %v2048
    %2070 = vmatpush.msra.mxu0 %v2046
    %2071 = vmatpush.msra.mxu0 %v2044
    %2072 = vmatmul.f32.gmra.mxu0 %v2054
    %v2073 = vpop.f32.mrf.mxu0
    %v2074 = vadd.f32 0.0, %v2073
    %2075 = vdwg.mxu0
    %v2076 = vpack.c.bf16 %v2074, %v2074
    %v2077 = vld [vmem:[%s6] sm:$0xf]
    %v2078 = vld [vmem:[%s6 + $0x4] sm:$0xf]
    %v2079 = vld [vmem:[%s6 + $0x8] sm:$0xf]
    %v2080 = vld [vmem:[%s6 + $0xc] sm:$0xf]
    %v2081 = vld [vmem:[%s7] sm:$0x1]
    %v2083 = vperm.slane %v2081, 0
    %v2089 = vunpack.c.l.b16 %v2077
    %v2090 = vunpack.c.l.b16 %v2078
    %v2091 = vunpack.c.l.b16 %v2079
    %v2092 = vunpack.c.l.b16 %v2080
    %v2093 = vpack.c.b16 %v2090, %v2089
    %v2094 = vpack.c.b16 %v2092, %v2091
    %v2098 = vsel %vm178, %v2076, 0
    %2100 = vmatpush.bf16.msra.mxu0 0
    %2101 = vmatpush.bf16.msra.mxu0 0
    %2102 = vmatpush.bf16.msra.mxu0 0
    %2103 = vmatpush.bf16.msra.mxu0 0
    %2104 = vmatpush.bf16.msra.mxu0 0
    %2105 = vmatpush.bf16.msra.mxu0 0
    %2106 = vmatpush.bf16.msra.mxu0 %v2094
    %2107 = vmatpush.bf16.msra.mxu0 %v2093
    %2108 = vmatmul.bf16.gmra.mxu0 %v2098
    %v2109 = vpop.f32.mrf.mxu0
    %v2110 = vadd.f32 %v2083, %v2109
    %v2111 = vpop.f32.mrf.mxu0
    %2112 = vdwg.mxu0
    %v2113 = vmax.f32 %v2110, 0.0
    %v2114 = vld [vmem:[%s10] sm:$0x1]
    %v2116 = vperm.slane %v2114, 0
    %v2118 = vsub.f32 %v2113, %v2116
    %v2119 = vld [vmem:[%s11] sm:$0x1]
    %v2120 = vadd.f32 %v2119, 1e-05
    %v2121 = vrsqrt.pop %v2120
    %v2122 = vmul.f32 %v2121, %v2120
    %v2123 = vmul.f32 %v2122, %v2121
    %v2124 = vmul.f32 0.5, %v2123
    %v2125 = vsub.f32 1.5, %v2124
    %v2126 = vmul.f32 %v2121, %v2125
    %vm2127 = vweird.f32 %v2120
    %vm2128 = vweird.f32 %v2121
    %vm2129 = vmor %vm2127, %vm2128
    %v2130 = vsel %vm2129, %v2121, %v2126
    %v2132 = vperm.slane %v2130, 0
    %v2134 = vmul.f32 %v2118, %v2132
    %v2135 = vld [vmem:[%s8] sm:$0x1]
    %v2137 = vperm.slane %v2135, 0
    %v2139 = vmul.f32 %v2134, %v2137
    %v2140 = vld [vmem:[%s9] sm:$0x1]
    %v2142 = vperm.slane %v2140, 0
    %v2144 = vadd.f32 %v2139, %v2142
    %v2145 = vpack.c.bf16 %v2144, %v2144
    %v2146 = vld [vmem:[%s12] sm:$0xf]
    %v2147 = vld [vmem:[%s12 + $0x4] sm:$0xf]
    %v2148 = vld [vmem:[%s12 + $0x8] sm:$0xf]
    %v2149 = vld [vmem:[%s12 + $0xc] sm:$0xf]
    %v2150 = vld [vmem:[%s13] sm:$0x1]
    %v2152 = vperm.slane %v2150, 0
    %v2158 = vunpack.c.l.b16 %v2146
    %v2159 = vunpack.c.l.b16 %v2147
    %v2160 = vunpack.c.l.b16 %v2148
    %v2161 = vunpack.c.l.b16 %v2149
    %v2162 = vpack.c.b16 %v2159, %v2158
    %v2163 = vpack.c.b16 %v2161, %v2160
    %v2167 = vsel %vm178, %v2145, 0
    %2169 = vmatpush.bf16.msra.mxu0 0
    %2170 = vmatpush.bf16.msra.mxu0 0
    %2171 = vmatpush.bf16.msra.mxu0 0
    %2172 = vmatpush.bf16.msra.mxu0 0
    %2173 = vmatpush.bf16.msra.mxu0 0
    %2174 = vmatpush.bf16.msra.mxu0 0
    %2175 = vmatpush.bf16.msra.mxu0 %v2163
    %2176 = vmatpush.bf16.msra.mxu0 %v2162
    %2177 = vmatmul.bf16.gmra.mxu0 %v2167
    %v2178 = vpop.f32.mrf.mxu0
    %v2179 = vadd.f32 %v2152, %v2178
    %v2180 = vpop.f32.mrf.mxu0
    %2181 = vdwg.mxu0
    %vm2182 = vcmask 19456
    %v2183 = vsel %vm2182, %v2179, -inf
    %v2184 = vrot.slane %v2183, 4
    %v2185 = vmax.f32 %v2183, %v2184
    %v2186 = vrot.slane %v2185, 2
    %v2187 = vmax.f32 %v2185, %v2186
    %v2188 = vrot.slane %v2187, 1
    %v2189 = vmax.f32 %v2187, %v2188
    %v2190 = vsub.f32 %v2179, %v2189
    %v2191 = vmul.f32 %v2190, 1.442695
    %v2192 = vpow.pop %v2191
    %v2193 = vsel %vm2182, %v2192, 0.0
    %v2194 = vrot.slane %v2193, 4
    %v2195 = vadd.f32 %v2193, %v2194
    %v2196 = vrot.slane %v2195, 2
    %v2197 = vadd.f32 %v2195, %v2196
    %v2198 = vrot.slane %v2197, 1
    %v2199 = vadd.f32 %v2197, %v2198
    %v2200 = vrcp.pop %v2199
    %v2201 = vmul.f32 %v2199, %v2200
    %v2202 = vsub.f32 1.0, %v2201
    %v2203 = vmul.f32 %v2200, %v2202
    %v2204 = vadd.f32 %v2200, %v2203
    %vm2205 = vweird.f32 %v2199
    %vm2206 = vweird.f32 %v2200
    %vm2207 = vmor %vm2205, %vm2206
    %v2208 = vsel %vm2207, %v2200, %v2204
    %v2209 = vand.u32 2147483647, %v2199
    %vm2210 = vcmp.eq.f32.partialorder %v2209, 8.507059e+37
    %v2211 = vand.u32 %v2199, 2147483648
    %v2212 = vor.u32 1.1754944e-38, %v2211
    %v2213 = vsel %vm2210, %v2212, %v2208
    %v2214 = vmul.f32 %v2192, %v2213
    %2215 = vst.msk [vmem:[#allocation2] sm:$0xf] %vm2182, %v2214
    // Predicated region
    $region58: #{tpu_custom_call.1} parent=1 // pred_check
      _
    $region59: #{tpu_custom_call.1} parent=1 // pred_check_branch
      %2217 = sbr.rel (0) target = $region61
    $region60: #{tpu_custom_call.1} parent=1 // pred_region
      %2219 = vsyncadd [#allocation3], 0
      %s2221 = sshll.u32 [#allocation2], 4
      %s2222 = int_to_ptr.vmem [resolvable:$true] %s2221
      %s2223 = sshll.u32 %s14, 4
      %s2224 = int_to_ptr.hbm [resolvable:$true] %s2223
      %2226 = dma.vmem_to_hbm [thread:$0]  %s2222, 64, %s2224, [#allocation3]
    $region61: #{tpu_custom_call.1} parent=1 // pred_fallthru
      _
    // Predicated region
    $region62: #{tpu_custom_call.1} parent=1 // pred_check
      _
    $region63: #{tpu_custom_call.1} parent=1 // pred_check_branch
      %2228 = sbr.rel (0) target = $region65
    $region64: #{tpu_custom_call.1} parent=1 // pred_region
      %2230 = dma.done [#allocation3], 64
    $region65: #{tpu_custom_call.1} parent=1 // pred_fallthru
      _
    %2231 = vsyncpa [#allocation3], 1

</llo_original>
